<compile_context>
chip_gen: v7x
topology: tpu7x:2x2x1
jax: 0.10.0
libtpu: 0.0.40
codegen_flags: <defaults>
</compile_context>

<pallas_src>
import math
from functools import partial

import jax
import jax.numpy as jnp
from jax.experimental import pallas as pl
from jax.experimental.pallas import tpu as pltpu


def _round_up(x, m):
    return ((x + m - 1) // m) * m


# ----------------------------- Pallas kernel ------------------------------ #
def _mha_kernel(q_ref, k_ref, v_ref,
                wq_ref, bq_ref, wk_ref, bk_ref, wv_ref, bv_ref,
                wo_ref, bo_ref, out_ref, *, num_heads, d_head):
    # Per batch element (lane-padded width Dp = round_up(d_model, 128)):
    #   q/k/v_ref : (S, Dp)
    #   w*_ref    : (Dp, Dp)   (pre-transposed: in_features x out_features)
    #   b*_ref    : (1, Dp)
    #   out_ref   : (S, Dp)
    xq = q_ref[...]
    xk = k_ref[...]
    xv = v_ref[...]

    # Fused Q/K/V projections: full-lane-width MXU matmuls, f32 accumulate.
    q = jnp.dot(xq, wq_ref[...], preferred_element_type=jnp.float32) + bq_ref[...]
    k = jnp.dot(xk, wk_ref[...], preferred_element_type=jnp.float32) + bk_ref[...]
    v = jnp.dot(xv, wv_ref[...], preferred_element_type=jnp.float32) + bv_ref[...]

    scale = 1.0 / math.sqrt(d_head)
    acc = jnp.zeros(out_ref.shape, jnp.float32)

    # Static unroll over heads (num_heads is small and compile-time constant).
    for h in range(num_heads):
        lo = h * d_head
        qh = q[:, lo:lo + d_head]                                   # (S, d_k)
        kh = k[:, lo:lo + d_head]                                   # (S, d_k)
        vh = v[:, lo:lo + d_head]                                   # (S, d_k)

        # scores = qh @ kh^T / sqrt(d_k)
        s = jnp.einsum("qd,kd->qk", qh, kh,
                       preferred_element_type=jnp.float32) * scale  # (S, S)
        s = s - jnp.max(s, axis=-1, keepdims=True)                  # stable softmax
        p = jnp.exp(s)
        p = p / jnp.sum(p, axis=-1, keepdims=True)

        oh = jnp.dot(p, vh, preferred_element_type=jnp.float32)     # (S, d_k)

        # Output projection folded in per head:
        #   concat(heads) @ Wo == sum_h  O_h @ Wo[h*d_k:(h+1)*d_k, :]
        acc = acc + jnp.dot(oh, wo_ref[lo:lo + d_head, :],
                            preferred_element_type=jnp.float32)     # (S, Dp)

    out_ref[...] = (acc + bo_ref[...]).astype(out_ref.dtype)


# -------------------------------- wrapper ---------------------------------- #
def multi_head_attention_forward(Q, K, V, params, *, num_heads):
    """Q, K, V: (B, S, d_model) float32.  params: pre-transposed weights."""
    B, S, d_model = Q.shape
    assert d_model % num_heads == 0
    d_head = d_model // num_heads
    Dp = _round_up(d_model, 128)      # lane-dense padding (no-op if 128-aligned)

    def pad_last(a):
        p = Dp - a.shape[-1]
        return a if p == 0 else jnp.pad(a, [(0, 0)] * (a.ndim - 1) + [(0, p)])

    def pad_w(w):
        p = Dp - d_model
        return w if p == 0 else jnp.pad(w, ((0, p), (0, p)))

    Qp, Kp, Vp = pad_last(Q), pad_last(K), pad_last(V)
    wq, bq = pad_w(params["wq"]), pad_last(params["bq"])
    wk, bk = pad_w(params["wk"]), pad_last(params["bk"])
    wv, bv = pad_w(params["wv"]), pad_last(params["bv"])
    wo, bo = pad_w(params["wo"]), pad_last(params["bo"])

    kernel = partial(_mha_kernel, num_heads=num_heads, d_head=d_head)

    x_map = lambda b: (b, 0, 0)       # per-batch activation tiles
    w_map = lambda b: (0, 0)          # constant -> weights stay VMEM-resident

    out_p = pl.pallas_call(
        kernel,
        out_shape=jax.ShapeDtypeStruct((B, S, Dp), jnp.float32),
        grid_spec=pltpu.PrefetchScalarGridSpec(
            num_scalar_prefetch=0,
            grid=(B,),
            in_specs=[
                pl.BlockSpec((None, S, Dp), x_map),   # Q   (batch dim squeezed)
                pl.BlockSpec((None, S, Dp), x_map),   # K
                pl.BlockSpec((None, S, Dp), x_map),   # V
                pl.BlockSpec((Dp, Dp), w_map),        # Wq
                pl.BlockSpec((1, Dp), w_map),         # bq
                pl.BlockSpec((Dp, Dp), w_map),        # Wk
                pl.BlockSpec((1, Dp), w_map),         # bk
                pl.BlockSpec((Dp, Dp), w_map),        # Wv
                pl.BlockSpec((1, Dp), w_map),         # bv
                pl.BlockSpec((Dp, Dp), w_map),        # Wo
                pl.BlockSpec((1, Dp), w_map),         # bo
            ],
            out_specs=pl.BlockSpec((None, S, Dp), x_map),
        ),
        compiler_params=pltpu.CompilerParams(
            dimension_semantics=("parallel",)),       # batch split across TCs (v7x)
    )(Qp, Kp, Vp, wq, bq, wk, bk, wv, bv, wo, bo)

    return out_p[:, :, :d_model]


# ------------------------------- reference --------------------------------- #
def reference_mha(Q, K, V, params, *, num_heads):
    B, S, D = Q.shape
    dh = D // num_heads
    hi = jax.lax.Precision.HIGHEST

    def proj(x, w, b):
        return jnp.einsum("bsd,de->bse", x, w, precision=hi) + b

    q = proj(Q, params["wq"], params["bq"]).reshape(B, S, num_heads, dh).transpose(0, 2, 1, 3)
    k = proj(K, params["wk"], params["bk"]).reshape(B, S, num_heads, dh).transpose(0, 2, 1, 3)
    v = proj(V, params["wv"], params["bv"]).reshape(B, S, num_heads, dh).transpose(0, 2, 1, 3)

    scores = jnp.einsum("bhqd,bhkd->bhqk", q, k, precision=hi) / math.sqrt(dh)
    attn = jax.nn.softmax(scores, axis=-1)
    ctx = jnp.einsum("bhqk,bhkd->bhqd", attn, v, precision=hi)
    ctx = ctx.transpose(0, 2, 1, 3).reshape(B, S, D)
    return jnp.einsum("bsd,de->bse", ctx, params["wo"], precision=hi) + params["bo"]


# --------------------------------- main ------------------------------------ #
if __name__ == "__main__":
    batch, seq, d_model, num_heads = 2, 8, 32, 4

    key = jax.random.PRNGKey(0)
    ks = jax.random.split(key, 11)
    Q = jax.random.normal(ks[0], (batch, seq, d_model), dtype=jnp.float32)
    K = jax.random.normal(ks[1], (batch, seq, d_model), dtype=jnp.float32)
    V = jax.random.normal(ks[2], (batch, seq, d_model), dtype=jnp.float32)

    # PyTorch nn.Linear default init: U(-1/sqrt(fan_in), +1/sqrt(fan_in)).
    lim = 1.0 / math.sqrt(d_model)

    def u(k, shape):
        return jax.random.uniform(k, shape, jnp.float32, -lim, lim)

    params = {
        # weights stored pre-transposed as (in_features, out_features)
        "wq": u(ks[3], (d_model, d_model)), "bq": u(ks[4], (1, d_model)),
        "wk": u(ks[5], (d_model, d_model)), "bk": u(ks[6], (1, d_model)),
        "wv": u(ks[7], (d_model, d_model)), "bv": u(ks[8], (1, d_model)),
        "wo": u(ks[9], (d_model, d_model)), "bo": u(ks[10], (1, d_model)),
    }

    out = multi_head_attention_forward(Q, K, V, params, num_heads=num_heads)
    out = jax.block_until_ready(out)

    ref = reference_mha(Q, K, V, params, num_heads=num_heads)
    assert out.shape == (batch, seq, d_model), out.shape
    assert jnp.allclose(out, ref, atol=1e-4, rtol=1e-4), "mismatch vs reference"

    print("KERNEL_OK")
</pallas_src>

<mosaic_0001>
module attributes {stable_mosaic.version = 11 : i64} {
  func.func @_mha_kernel(%arg0: i32, %arg1: memref<1x8x128xf32, #tpu.memory_space<vmem>>, %arg2: memref<1x8x128xf32, #tpu.memory_space<vmem>>, %arg3: memref<1x8x128xf32, #tpu.memory_space<vmem>>, %arg4: memref<128x128xf32, #tpu.memory_space<vmem>>, %arg5: memref<1x128xf32, #tpu.memory_space<vmem>>, %arg6: memref<128x128xf32, #tpu.memory_space<vmem>>, %arg7: memref<1x128xf32, #tpu.memory_space<vmem>>, %arg8: memref<128x128xf32, #tpu.memory_space<vmem>>, %arg9: memref<1x128xf32, #tpu.memory_space<vmem>>, %arg10: memref<128x128xf32, #tpu.memory_space<vmem>>, %arg11: memref<1x128xf32, #tpu.memory_space<vmem>>, %arg12: memref<1x8x128xf32, #tpu.memory_space<vmem>>) attributes {dimension_semantics = [#tpu.dimension_semantics<parallel>], iteration_bounds = array<i64: 2>, scalar_prefetch = 0 : i64, scratch_operands = 0 : i64, tpu.core_type = #tpu.core_type<tc>, window_params = [{transform_indices = @transform_0, window_bounds = array<i64: 1, 8, 128>}, {transform_indices = @transform_1, window_bounds = array<i64: 1, 8, 128>}, {transform_indices = @transform_2, window_bounds = array<i64: 1, 8, 128>}, {pipeline_mode = #tpu.pipeline_mode<synchronous>, transform_indices = @transform_3, window_bounds = array<i64: 128, 128>}, {pipeline_mode = #tpu.pipeline_mode<synchronous>, transform_indices = @transform_4, window_bounds = array<i64: 1, 128>}, {pipeline_mode = #tpu.pipeline_mode<synchronous>, transform_indices = @transform_5, window_bounds = array<i64: 128, 128>}, {pipeline_mode = #tpu.pipeline_mode<synchronous>, transform_indices = @transform_6, window_bounds = array<i64: 1, 128>}, {pipeline_mode = #tpu.pipeline_mode<synchronous>, transform_indices = @transform_7, window_bounds = array<i64: 128, 128>}, {pipeline_mode = #tpu.pipeline_mode<synchronous>, transform_indices = @transform_8, window_bounds = array<i64: 1, 128>}, {pipeline_mode = #tpu.pipeline_mode<synchronous>, transform_indices = @transform_9, window_bounds = array<i64: 128, 128>}, {pipeline_mode = #tpu.pipeline_mode<synchronous>, transform_indices = @transform_10, window_bounds = array<i64: 1, 128>}, {transform_indices = @transform_11, window_bounds = array<i64: 1, 8, 128>}]} {
    %c0 = arith.constant 0 : index
    %c0_0 = arith.constant 0 : index
    %c0_1 = arith.constant 0 : index
    %0 = vector.load %arg1[%c0, %c0_0, %c0_1] : memref<1x8x128xf32, #tpu.memory_space<vmem>>, vector<1x8x128xf32>
    %1 = vector.shape_cast %0 : vector<1x8x128xf32> to vector<8x128xf32>
    %c0_2 = arith.constant 0 : index
    %c0_3 = arith.constant 0 : index
    %c0_4 = arith.constant 0 : index
    %2 = vector.load %arg2[%c0_2, %c0_3, %c0_4] : memref<1x8x128xf32, #tpu.memory_space<vmem>>, vector<1x8x128xf32>
    %3 = vector.shape_cast %2 : vector<1x8x128xf32> to vector<8x128xf32>
    %c0_5 = arith.constant 0 : index
    %c0_6 = arith.constant 0 : index
    %c0_7 = arith.constant 0 : index
    %4 = vector.load %arg3[%c0_5, %c0_6, %c0_7] : memref<1x8x128xf32, #tpu.memory_space<vmem>>, vector<1x8x128xf32>
    %5 = vector.shape_cast %4 : vector<1x8x128xf32> to vector<8x128xf32>
    %c0_8 = arith.constant 0 : index
    %c0_9 = arith.constant 0 : index
    %6 = vector.load %arg4[%c0_8, %c0_9] : memref<128x128xf32, #tpu.memory_space<vmem>>, vector<128x128xf32>
    %cst = arith.constant dense<0.000000e+00> : vector<8x128xf32>
    %7 = tpu.matmul %1, %6, %cst {dimension_numbers = #tpu.dot_dimension_numbers<[1], [0], [0], [1], [0, 0, 1, 1], [], []>} : vector<8x128xf32>, vector<128x128xf32>, vector<8x128xf32> -> vector<8x128xf32>
    %c0_10 = arith.constant 0 : index
    %c0_11 = arith.constant 0 : index
    %8 = vector.load %arg5[%c0_10, %c0_11] : memref<1x128xf32, #tpu.memory_space<vmem>>, vector<1x128xf32>
    %9 = vector.broadcast %8 : vector<1x128xf32> to vector<8x128xf32>
    %10 = arith.addf %7, %9 : vector<8x128xf32>
    %c0_12 = arith.constant 0 : index
    %c0_13 = arith.constant 0 : index
    %11 = vector.load %arg6[%c0_12, %c0_13] : memref<128x128xf32, #tpu.memory_space<vmem>>, vector<128x128xf32>
    %cst_14 = arith.constant dense<0.000000e+00> : vector<8x128xf32>
    %12 = tpu.matmul %3, %11, %cst_14 {dimension_numbers = #tpu.dot_dimension_numbers<[1], [0], [0], [1], [0, 0, 1, 1], [], []>} : vector<8x128xf32>, vector<128x128xf32>, vector<8x128xf32> -> vector<8x128xf32>
    %c0_15 = arith.constant 0 : index
    %c0_16 = arith.constant 0 : index
    %13 = vector.load %arg7[%c0_15, %c0_16] : memref<1x128xf32, #tpu.memory_space<vmem>>, vector<1x128xf32>
    %14 = vector.broadcast %13 : vector<1x128xf32> to vector<8x128xf32>
    %15 = arith.addf %12, %14 : vector<8x128xf32>
    %c0_17 = arith.constant 0 : index
    %c0_18 = arith.constant 0 : index
    %16 = vector.load %arg8[%c0_17, %c0_18] : memref<128x128xf32, #tpu.memory_space<vmem>>, vector<128x128xf32>
    %cst_19 = arith.constant dense<0.000000e+00> : vector<8x128xf32>
    %17 = tpu.matmul %5, %16, %cst_19 {dimension_numbers = #tpu.dot_dimension_numbers<[1], [0], [0], [1], [0, 0, 1, 1], [], []>} : vector<8x128xf32>, vector<128x128xf32>, vector<8x128xf32> -> vector<8x128xf32>
    %c0_20 = arith.constant 0 : index
    %c0_21 = arith.constant 0 : index
    %18 = vector.load %arg9[%c0_20, %c0_21] : memref<1x128xf32, #tpu.memory_space<vmem>>, vector<1x128xf32>
    %19 = vector.broadcast %18 : vector<1x128xf32> to vector<8x128xf32>
    %20 = arith.addf %17, %19 : vector<8x128xf32>
    %cst_22 = arith.constant 0.000000e+00 : f32
    %21 = vector.broadcast %cst_22 : f32 to vector<8x128xf32>
    %22 = vector.extract_strided_slice %10 {offsets = [0, 0], sizes = [8, 8], strides = [1, 1]} : vector<8x128xf32> to vector<8x8xf32>
    %23 = vector.extract_strided_slice %15 {offsets = [0, 0], sizes = [8, 8], strides = [1, 1]} : vector<8x128xf32> to vector<8x8xf32>
    %24 = vector.extract_strided_slice %20 {offsets = [0, 0], sizes = [8, 8], strides = [1, 1]} : vector<8x128xf32> to vector<8x8xf32>
    "tpu.trace_start"() <{level = 10 : i32, message = "qd,kd->qk"}> : () -> ()
    %cst_23 = arith.constant dense<0.000000e+00> : vector<8x8xf32>
    %25 = tpu.matmul %22, %23, %cst_23 {dimension_numbers = #tpu.dot_dimension_numbers<[1], [1], [0], [0], [0, 0, 1, 0], [], []>} : vector<8x8xf32>, vector<8x8xf32>, vector<8x8xf32> -> vector<8x8xf32>
    "tpu.trace_stop"() : () -> ()
    %cst_24 = arith.constant 0.353553385 : f32
    %26 = vector.broadcast %cst_24 : f32 to vector<8x8xf32>
    %27 = arith.mulf %25, %26 : vector<8x8xf32>
    %cst_25 = arith.constant dense<0xFF800000> : vector<8xf32>
    %28 = vector.multi_reduction <maximumf>, %27, %cst_25 [1] : vector<8x8xf32> to vector<8xf32>
    %29 = vector.shape_cast %28 : vector<8xf32> to vector<8x1xf32>
    %30 = vector.broadcast %29 : vector<8x1xf32> to vector<8x8xf32>
    %31 = arith.subf %27, %30 : vector<8x8xf32>
    %32 = math.exp %31 : vector<8x8xf32>
    %cst_26 = arith.constant dense<0.000000e+00> : vector<8xf32>
    %33 = vector.multi_reduction <add>, %32, %cst_26 [1] : vector<8x8xf32> to vector<8xf32>
    %34 = vector.shape_cast %33 : vector<8xf32> to vector<8x1xf32>
    %35 = vector.broadcast %34 : vector<8x1xf32> to vector<8x8xf32>
    %36 = arith.divf %32, %35 : vector<8x8xf32>
    %cst_27 = arith.constant dense<0.000000e+00> : vector<8x8xf32>
    %37 = tpu.matmul %36, %24, %cst_27 {dimension_numbers = #tpu.dot_dimension_numbers<[1], [0], [0], [1], [0, 0, 1, 1], [], []>} : vector<8x8xf32>, vector<8x8xf32>, vector<8x8xf32> -> vector<8x8xf32>
    %c0_28 = arith.constant 0 : index
    %c0_29 = arith.constant 0 : index
    %38 = vector.load %arg10[%c0_28, %c0_29] : memref<128x128xf32, #tpu.memory_space<vmem>>, vector<8x128xf32>
    %cst_30 = arith.constant dense<0.000000e+00> : vector<8x128xf32>
    %39 = tpu.matmul %37, %38, %cst_30 {dimension_numbers = #tpu.dot_dimension_numbers<[1], [0], [0], [1], [0, 0, 1, 1], [], []>} : vector<8x8xf32>, vector<8x128xf32>, vector<8x128xf32> -> vector<8x128xf32>
    %40 = arith.addf %21, %39 : vector<8x128xf32>
    %41 = vector.extract_strided_slice %10 {offsets = [0, 8], sizes = [8, 8], strides = [1, 1]} : vector<8x128xf32> to vector<8x8xf32>
    %42 = vector.extract_strided_slice %15 {offsets = [0, 8], sizes = [8, 8], strides = [1, 1]} : vector<8x128xf32> to vector<8x8xf32>
    %43 = vector.extract_strided_slice %20 {offsets = [0, 8], sizes = [8, 8], strides = [1, 1]} : vector<8x128xf32> to vector<8x8xf32>
    "tpu.trace_start"() <{level = 10 : i32, message = "qd,kd->qk"}> : () -> ()
    %cst_31 = arith.constant dense<0.000000e+00> : vector<8x8xf32>
    %44 = tpu.matmul %41, %42, %cst_31 {dimension_numbers = #tpu.dot_dimension_numbers<[1], [1], [0], [0], [0, 0, 1, 0], [], []>} : vector<8x8xf32>, vector<8x8xf32>, vector<8x8xf32> -> vector<8x8xf32>
    "tpu.trace_stop"() : () -> ()
    %cst_32 = arith.constant 0.353553385 : f32
    %45 = vector.broadcast %cst_32 : f32 to vector<8x8xf32>
    %46 = arith.mulf %44, %45 : vector<8x8xf32>
    %cst_33 = arith.constant dense<0xFF800000> : vector<8xf32>
    %47 = vector.multi_reduction <maximumf>, %46, %cst_33 [1] : vector<8x8xf32> to vector<8xf32>
    %48 = vector.shape_cast %47 : vector<8xf32> to vector<8x1xf32>
    %49 = vector.broadcast %48 : vector<8x1xf32> to vector<8x8xf32>
    %50 = arith.subf %46, %49 : vector<8x8xf32>
    %51 = math.exp %50 : vector<8x8xf32>
    %cst_34 = arith.constant dense<0.000000e+00> : vector<8xf32>
    %52 = vector.multi_reduction <add>, %51, %cst_34 [1] : vector<8x8xf32> to vector<8xf32>
    %53 = vector.shape_cast %52 : vector<8xf32> to vector<8x1xf32>
    %54 = vector.broadcast %53 : vector<8x1xf32> to vector<8x8xf32>
    %55 = arith.divf %51, %54 : vector<8x8xf32>
    %cst_35 = arith.constant dense<0.000000e+00> : vector<8x8xf32>
    %56 = tpu.matmul %55, %43, %cst_35 {dimension_numbers = #tpu.dot_dimension_numbers<[1], [0], [0], [1], [0, 0, 1, 1], [], []>} : vector<8x8xf32>, vector<8x8xf32>, vector<8x8xf32> -> vector<8x8xf32>
    %c8 = arith.constant 8 : index
    %c0_36 = arith.constant 0 : index
    %57 = vector.load %arg10[%c8, %c0_36] : memref<128x128xf32, #tpu.memory_space<vmem>>, vector<8x128xf32>
    %cst_37 = arith.constant dense<0.000000e+00> : vector<8x128xf32>
    %58 = tpu.matmul %56, %57, %cst_37 {dimension_numbers = #tpu.dot_dimension_numbers<[1], [0], [0], [1], [0, 0, 1, 1], [], []>} : vector<8x8xf32>, vector<8x128xf32>, vector<8x128xf32> -> vector<8x128xf32>
    %59 = arith.addf %40, %58 : vector<8x128xf32>
    %60 = vector.extract_strided_slice %10 {offsets = [0, 16], sizes = [8, 8], strides = [1, 1]} : vector<8x128xf32> to vector<8x8xf32>
    %61 = vector.extract_strided_slice %15 {offsets = [0, 16], sizes = [8, 8], strides = [1, 1]} : vector<8x128xf32> to vector<8x8xf32>
    %62 = vector.extract_strided_slice %20 {offsets = [0, 16], sizes = [8, 8], strides = [1, 1]} : vector<8x128xf32> to vector<8x8xf32>
    "tpu.trace_start"() <{level = 10 : i32, message = "qd,kd->qk"}> : () -> ()
    %cst_38 = arith.constant dense<0.000000e+00> : vector<8x8xf32>
    %63 = tpu.matmul %60, %61, %cst_38 {dimension_numbers = #tpu.dot_dimension_numbers<[1], [1], [0], [0], [0, 0, 1, 0], [], []>} : vector<8x8xf32>, vector<8x8xf32>, vector<8x8xf32> -> vector<8x8xf32>
    "tpu.trace_stop"() : () -> ()
    %cst_39 = arith.constant 0.353553385 : f32
    %64 = vector.broadcast %cst_39 : f32 to vector<8x8xf32>
    %65 = arith.mulf %63, %64 : vector<8x8xf32>
    %cst_40 = arith.constant dense<0xFF800000> : vector<8xf32>
    %66 = vector.multi_reduction <maximumf>, %65, %cst_40 [1] : vector<8x8xf32> to vector<8xf32>
    %67 = vector.shape_cast %66 : vector<8xf32> to vector<8x1xf32>
    %68 = vector.broadcast %67 : vector<8x1xf32> to vector<8x8xf32>
    %69 = arith.subf %65, %68 : vector<8x8xf32>
    %70 = math.exp %69 : vector<8x8xf32>
    %cst_41 = arith.constant dense<0.000000e+00> : vector<8xf32>
    %71 = vector.multi_reduction <add>, %70, %cst_41 [1] : vector<8x8xf32> to vector<8xf32>
    %72 = vector.shape_cast %71 : vector<8xf32> to vector<8x1xf32>
    %73 = vector.broadcast %72 : vector<8x1xf32> to vector<8x8xf32>
    %74 = arith.divf %70, %73 : vector<8x8xf32>
    %cst_42 = arith.constant dense<0.000000e+00> : vector<8x8xf32>
    %75 = tpu.matmul %74, %62, %cst_42 {dimension_numbers = #tpu.dot_dimension_numbers<[1], [0], [0], [1], [0, 0, 1, 1], [], []>} : vector<8x8xf32>, vector<8x8xf32>, vector<8x8xf32> -> vector<8x8xf32>
    %c16 = arith.constant 16 : index
    %c0_43 = arith.constant 0 : index
    %76 = vector.load %arg10[%c16, %c0_43] : memref<128x128xf32, #tpu.memory_space<vmem>>, vector<8x128xf32>
    %cst_44 = arith.constant dense<0.000000e+00> : vector<8x128xf32>
    %77 = tpu.matmul %75, %76, %cst_44 {dimension_numbers = #tpu.dot_dimension_numbers<[1], [0], [0], [1], [0, 0, 1, 1], [], []>} : vector<8x8xf32>, vector<8x128xf32>, vector<8x128xf32> -> vector<8x128xf32>
    %78 = arith.addf %59, %77 : vector<8x128xf32>
    %79 = vector.extract_strided_slice %10 {offsets = [0, 24], sizes = [8, 8], strides = [1, 1]} : vector<8x128xf32> to vector<8x8xf32>
    %80 = vector.extract_strided_slice %15 {offsets = [0, 24], sizes = [8, 8], strides = [1, 1]} : vector<8x128xf32> to vector<8x8xf32>
    %81 = vector.extract_strided_slice %20 {offsets = [0, 24], sizes = [8, 8], strides = [1, 1]} : vector<8x128xf32> to vector<8x8xf32>
    "tpu.trace_start"() <{level = 10 : i32, message = "qd,kd->qk"}> : () -> ()
    %cst_45 = arith.constant dense<0.000000e+00> : vector<8x8xf32>
    %82 = tpu.matmul %79, %80, %cst_45 {dimension_numbers = #tpu.dot_dimension_numbers<[1], [1], [0], [0], [0, 0, 1, 0], [], []>} : vector<8x8xf32>, vector<8x8xf32>, vector<8x8xf32> -> vector<8x8xf32>
    "tpu.trace_stop"() : () -> ()
    %cst_46 = arith.constant 0.353553385 : f32
    %83 = vector.broadcast %cst_46 : f32 to vector<8x8xf32>
    %84 = arith.mulf %82, %83 : vector<8x8xf32>
    %cst_47 = arith.constant dense<0xFF800000> : vector<8xf32>
    %85 = vector.multi_reduction <maximumf>, %84, %cst_47 [1] : vector<8x8xf32> to vector<8xf32>
    %86 = vector.shape_cast %85 : vector<8xf32> to vector<8x1xf32>
    %87 = vector.broadcast %86 : vector<8x1xf32> to vector<8x8xf32>
    %88 = arith.subf %84, %87 : vector<8x8xf32>
    %89 = math.exp %88 : vector<8x8xf32>
    %cst_48 = arith.constant dense<0.000000e+00> : vector<8xf32>
    %90 = vector.multi_reduction <add>, %89, %cst_48 [1] : vector<8x8xf32> to vector<8xf32>
    %91 = vector.shape_cast %90 : vector<8xf32> to vector<8x1xf32>
    %92 = vector.broadcast %91 : vector<8x1xf32> to vector<8x8xf32>
    %93 = arith.divf %89, %92 : vector<8x8xf32>
    %cst_49 = arith.constant dense<0.000000e+00> : vector<8x8xf32>
    %94 = tpu.matmul %93, %81, %cst_49 {dimension_numbers = #tpu.dot_dimension_numbers<[1], [0], [0], [1], [0, 0, 1, 1], [], []>} : vector<8x8xf32>, vector<8x8xf32>, vector<8x8xf32> -> vector<8x8xf32>
    %c24 = arith.constant 24 : index
    %c0_50 = arith.constant 0 : index
    %95 = vector.load %arg10[%c24, %c0_50] : memref<128x128xf32, #tpu.memory_space<vmem>>, vector<8x128xf32>
    %cst_51 = arith.constant dense<0.000000e+00> : vector<8x128xf32>
    %96 = tpu.matmul %94, %95, %cst_51 {dimension_numbers = #tpu.dot_dimension_numbers<[1], [0], [0], [1], [0, 0, 1, 1], [], []>} : vector<8x8xf32>, vector<8x128xf32>, vector<8x128xf32> -> vector<8x128xf32>
    %97 = arith.addf %78, %96 : vector<8x128xf32>
    %c0_52 = arith.constant 0 : index
    %c0_53 = arith.constant 0 : index
    %98 = vector.load %arg11[%c0_52, %c0_53] : memref<1x128xf32, #tpu.memory_space<vmem>>, vector<1x128xf32>
    %99 = vector.broadcast %98 : vector<1x128xf32> to vector<8x128xf32>
    %100 = arith.addf %97, %99 : vector<8x128xf32>
    %c0_54 = arith.constant 0 : index
    %c0_55 = arith.constant 0 : index
    %c0_56 = arith.constant 0 : index
    %101 = vector.load %arg12[%c0_54, %c0_55, %c0_56] : memref<1x8x128xf32, #tpu.memory_space<vmem>>, vector<1x8x128xf32>
    %102 = vector.shape_cast %101 : vector<1x8x128xf32> to vector<8x128xf32>
    %103 = vector.shape_cast %100 : vector<8x128xf32> to vector<1x8x128xf32>
    tpu.vector_store %arg12[%c0_54, %c0_55, %c0_56], %103 {strides = array<i32>} : memref<1x8x128xf32, #tpu.memory_space<vmem>>, vector<1x8x128xf32>,
    return
  }
  func.func @transform_0(%arg0: i32) -> (i32, i32, i32) {
    %c0_i32 = arith.constant 0 : i32
    %c0_i32_0 = arith.constant 0 : i32
    %c0_i32_1 = arith.constant 0 : i32
    return %arg0, %c0_i32, %c0_i32_0 : i32, i32, i32
  }
  func.func @transform_1(%arg0: i32) -> (i32, i32, i32) {
    %c0_i32 = arith.constant 0 : i32
    %c0_i32_0 = arith.constant 0 : i32
    %c0_i32_1 = arith.constant 0 : i32
    return %arg0, %c0_i32, %c0_i32_0 : i32, i32, i32
  }
  func.func @transform_2(%arg0: i32) -> (i32, i32, i32) {
    %c0_i32 = arith.constant 0 : i32
    %c0_i32_0 = arith.constant 0 : i32
    %c0_i32_1 = arith.constant 0 : i32
    return %arg0, %c0_i32, %c0_i32_0 : i32, i32, i32
  }
  func.func @transform_3(%arg0: i32) -> (i32, i32) {
    %c0_i32 = arith.constant 0 : i32
    %c0_i32_0 = arith.constant 0 : i32
    %c0_i32_1 = arith.constant 0 : i32
    return %c0_i32, %c0_i32_0 : i32, i32
  }
  func.func @transform_4(%arg0: i32) -> (i32, i32) {
    %c0_i32 = arith.constant 0 : i32
    %c0_i32_0 = arith.constant 0 : i32
    %c0_i32_1 = arith.constant 0 : i32
    return %c0_i32, %c0_i32_0 : i32, i32
  }
  func.func @transform_5(%arg0: i32) -> (i32, i32) {
    %c0_i32 = arith.constant 0 : i32
    %c0_i32_0 = arith.constant 0 : i32
    %c0_i32_1 = arith.constant 0 : i32
    return %c0_i32, %c0_i32_0 : i32, i32
  }
  func.func @transform_6(%arg0: i32) -> (i32, i32) {
    %c0_i32 = arith.constant 0 : i32
    %c0_i32_0 = arith.constant 0 : i32
    %c0_i32_1 = arith.constant 0 : i32
    return %c0_i32, %c0_i32_0 : i32, i32
  }
  func.func @transform_7(%arg0: i32) -> (i32, i32) {
    %c0_i32 = arith.constant 0 : i32
    %c0_i32_0 = arith.constant 0 : i32
    %c0_i32_1 = arith.constant 0 : i32
    return %c0_i32, %c0_i32_0 : i32, i32
  }
  func.func @transform_8(%arg0: i32) -> (i32, i32) {
    %c0_i32 = arith.constant 0 : i32
    %c0_i32_0 = arith.constant 0 : i32
    %c0_i32_1 = arith.constant 0 : i32
    return %c0_i32, %c0_i32_0 : i32, i32
  }
  func.func @transform_9(%arg0: i32) -> (i32, i32) {
    %c0_i32 = arith.constant 0 : i32
    %c0_i32_0 = arith.constant 0 : i32
    %c0_i32_1 = arith.constant 0 : i32
    return %c0_i32, %c0_i32_0 : i32, i32
  }
  func.func @transform_10(%arg0: i32) -> (i32, i32) {
    %c0_i32 = arith.constant 0 : i32
    %c0_i32_0 = arith.constant 0 : i32
    %c0_i32_1 = arith.constant 0 : i32
    return %c0_i32, %c0_i32_0 : i32, i32
  }
  func.func @transform_11(%arg0: i32) -> (i32, i32, i32) {
    %c0_i32 = arith.constant 0 : i32
    %c0_i32_0 = arith.constant 0 : i32
    %c0_i32_1 = arith.constant 0 : i32
    return %arg0, %c0_i32, %c0_i32_0 : i32, i32, i32
  }
}

</mosaic_0001>

<llo_original>
// kernel: tpu_custom_call.1
$region0: #{tpu_custom_call.1}
  #allocation0 [shape = 'u32[]', space=smem, size = 0x4, offset = 0x4, fixed_abs, tag = 'smem constant byte address 0x4 - core index']
  #allocation1 [shape = 'u32[144,128]{1,0:T(1,128)}', space=vmem, size = 0x12000, scoped, tag = 'internal scratch']
  %s0 = inlined_call_operand.hbm [shape: f32[2,8,128], index: 0, kind: input, shape index: {}]
  %s1 = inlined_call_operand.hbm [shape: f32[2,8,128], index: 1, kind: input, shape index: {}]
  %s2 = inlined_call_operand.hbm [shape: f32[2,8,128], index: 2, kind: input, shape index: {}]
  %s3 = inlined_call_operand.hbm [shape: f32[128,128], index: 3, kind: input, shape index: {}]
  %s4 = inlined_call_operand.vmem [shape: f32[1,128], index: 4, kind: input, shape index: {}]
  %s5 = inlined_call_operand.hbm [shape: f32[128,128], index: 5, kind: input, shape index: {}]
  %s6 = inlined_call_operand.vmem [shape: f32[1,128], index: 6, kind: input, shape index: {}]
  %s7 = inlined_call_operand.hbm [shape: f32[128,128], index: 7, kind: input, shape index: {}]
  %s8 = inlined_call_operand.vmem [shape: f32[1,128], index: 8, kind: input, shape index: {}]
  %s9 = inlined_call_operand.hbm [shape: f32[128,128], index: 9, kind: input, shape index: {}]
  %s10 = inlined_call_operand.vmem [shape: f32[1,128], index: 10, kind: input, shape index: {}]
  %s11 = inlined_call_operand.hbm [shape: f32[2,8,128], index: 11, kind: output, shape index: {}]
  %s12 = sld [smem:[#allocation0]]
  $region105: #{tpu_custom_call.1} parent=0
    _
  %s14 = ssub.s32 1, %s12
  %s15 = scalar_select 0, %s14, %s12
  $region1: #{tpu_custom_call.1} parent=0
    #allocation2 [shape = 'u8[8192]{0}', space=vmem, size = 0x2000, scoped, tag = 'input window, operand 0']
    #allocation3 [shape = 's32[2]{0}', space=sflag, size = 0x8, scoped, tag = 'scoped memory for tpu_custom_call.1']
    #allocation4 [shape = 's32[2]{0}', space=sflag, size = 0x8, scoped, tag = 'scoped memory for tpu_custom_call.1']
    #allocation5 [shape = 'u8[8192]{0}', space=vmem, size = 0x2000, scoped, tag = 'input window, operand 1']
    #allocation6 [shape = 's32[2]{0}', space=sflag, size = 0x8, scoped, tag = 'scoped memory for tpu_custom_call.1']
    #allocation7 [shape = 'u8[8192]{0}', space=vmem, size = 0x2000, scoped, tag = 'input window, operand 2']
    #allocation8 [shape = 'u8[65536]{0}', space=vmem, size = 0x10000, scoped, tag = 'input window, operand 3, single buffered']
    #allocation9 [shape = 's32[1]{0}', space=sflag, size = 0x4, scoped, tag = 'scoped memory for tpu_custom_call.1']
    #allocation10 [shape = 'u8[65536]{0}', space=vmem, size = 0x10000, scoped, tag = 'input window, operand 5, single buffered']
    #allocation11 [shape = 'u8[65536]{0}', space=vmem, size = 0x10000, scoped, tag = 'input window, operand 7, single buffered']
    #allocation12 [shape = 's32[1]{0}', space=sflag, size = 0x4, scoped, tag = 'scoped memory for tpu_custom_call.1']
    #allocation13 [shape = 'u8[65536]{0}', space=vmem, size = 0x10000, scoped, tag = 'input window, operand 9, single buffered']
    #allocation14 [shape = 'u8[8192]{0}', space=vmem, size = 0x2000, scoped, tag = 'output window, operand 0']
    %16 = vsyncpa [#allocation3], 0
    %s17 = scalar_lea.sflag [#allocation3], 1
    %18 = vsyncpa %s17, 0
    %19 = vsyncpa [#allocation6], 0
    %s20 = scalar_lea.sflag [#allocation6], 1
    %21 = vsyncpa %s20, 0
    %22 = vsyncpa [#allocation9], 0
    %23 = vsyncpa [#allocation12], 0
    %24 = vsyncpa [#allocation4], 0
    %s25 = scalar_lea.sflag [#allocation4], 1
    %26 = vsyncpa %s25, 0
    loop: start=0, step=1, limit=4
    $region2: #{tpu_custom_call.1} parent=1 // loop_pre_header
      _
    $region3: #{tpu_custom_call.1} parent=1 // loop_header
      %s28 = sphi 0, %s32
      %p29 = scmp.ge.s32.totalorder %s28, 4
      %s38 = sphi 0, %s40
      %s41 = sphi 0, %s38
      %s42 = sphi 0, %s41
      %s58 = sphi 0, %s42
      %s64 = sphi 0, %s66
      %s67 = sphi 0, %s64
      %s68 = sphi 0, %s67
      %s84 = sphi 0, %s68
      %s90 = sphi 0, %s92
      %s93 = sphi 0, %s90
      %s94 = sphi 0, %s93
      %s110 = sphi 0, %s94
      %s114 = sphi 0, %s114
      %s116 = sphi 0, %s114
      %s117 = sphi 0, %s116
      %s131 = sphi 0, %s117
      %s135 = sphi 0, %s135
      %s137 = sphi 0, %s135
      %s138 = sphi 0, %s137
      %s152 = sphi 0, %s138
      %s156 = sphi 0, %s156
      %s158 = sphi 0, %s156
      %s159 = sphi 0, %s158
      %s173 = sphi 0, %s159
      %s177 = sphi 0, %s177
      %s179 = sphi 0, %s177
      %s180 = sphi 0, %s179
      %s194 = sphi 0, %s180
      %s198 = sphi 0, %s198
      %s200 = sphi 0, %s198
      %s201 = sphi 0, %s200
      %s215 = sphi 0, %s201
      %s219 = sphi 0, %s219
      %s221 = sphi 0, %s219
      %s222 = sphi 0, %s221
      %s236 = sphi 0, %s222
      %s240 = sphi 0, %s240
      %s242 = sphi 0, %s240
      %s243 = sphi 0, %s242
      %s257 = sphi 0, %s243
      %s261 = sphi 0, %s261
      %s263 = sphi 0, %s261
      %s264 = sphi 0, %s263
      %s278 = sphi 0, %s264
      %s284 = sphi 0, %s286
      %s287 = sphi 0, %s284
      %s288 = sphi 0, %s287
      %s304 = sphi 0, %s288
    $region4: #{tpu_custom_call.1} parent=1 // loop_header_branch
      %31 = sbr.rel (%p29) target = $region8
    $region5: #{tpu_custom_call.1} parent=1 // loop_body
      %s33 = ssub.s32 %s28, 1
      %s34 = ssub.s32 %s28, 2
      %s35 = sadd.s32 %s28, 1
      %s36 = ssub.s32 %s28, %s35
      %p37 = scmp.eq.s32.totalorder %s36, 0
      %s39 = sadd.s32 %s38, 1
      %s40 = scalar_select %p37, %s38, %s39
      %p43 = pneg %p37
      %p44 = scmp.eq.s32.totalorder %s28, 1
      %p45 = por %p43, %p44
      %p46 = scmp.ne.s32.totalorder %s38, %s41
      %p47 = scmp.eq.s32.totalorder %s28, 0
      %p48 = por %p46, %p47
      %p49 = scmp.ne.s32.totalorder %s38, %s41
      %p50 = scmp.eq.s32.totalorder %s33, 1
      %p51 = por %p49, %p50
      %p52 = scmp.ne.s32.totalorder %s41, %s42
      %p53 = scmp.eq.s32.totalorder %s33, 0
      %p54 = por %p52, %p53
      %p55 = scmp.ne.s32.totalorder %s41, %s42
      %p56 = scmp.eq.s32.totalorder %s34, 1
      %p57 = por %p55, %p56
      %p59 = scmp.ne.s32.totalorder %s42, %s58
      %p60 = scmp.eq.s32.totalorder %s34, 0
      %p61 = por %p59, %p60
      %s62 = ssub.s32 %s28, %s35
      %p63 = scmp.eq.s32.totalorder %s62, 0
      %s65 = sadd.s32 %s64, 1
      %s66 = scalar_select %p63, %s64, %s65
      %p69 = pneg %p63
      %p70 = scmp.eq.s32.totalorder %s28, 1
      %p71 = por %p69, %p70
      %p72 = scmp.ne.s32.totalorder %s64, %s67
      %p73 = scmp.eq.s32.totalorder %s28, 0
      %p74 = por %p72, %p73
      %p75 = scmp.ne.s32.totalorder %s64, %s67
      %p76 = scmp.eq.s32.totalorder %s33, 1
      %p77 = por %p75, %p76
      %p78 = scmp.ne.s32.totalorder %s67, %s68
      %p79 = scmp.eq.s32.totalorder %s33, 0
      %p80 = por %p78, %p79
      %p81 = scmp.ne.s32.totalorder %s67, %s68
      %p82 = scmp.eq.s32.totalorder %s34, 1
      %p83 = por %p81, %p82
      %p85 = scmp.ne.s32.totalorder %s68, %s84
      %p86 = scmp.eq.s32.totalorder %s34, 0
      %p87 = por %p85, %p86
      %s88 = ssub.s32 %s28, %s35
      %p89 = scmp.eq.s32.totalorder %s88, 0
      %s91 = sadd.s32 %s90, 1
      %s92 = scalar_select %p89, %s90, %s91
      %p95 = pneg %p89
      %p96 = scmp.eq.s32.totalorder %s28, 1
      %p97 = por %p95, %p96
      %p98 = scmp.ne.s32.totalorder %s90, %s93
      %p99 = scmp.eq.s32.totalorder %s28, 0
      %p100 = por %p98, %p99
      %p101 = scmp.ne.s32.totalorder %s90, %s93
      %p102 = scmp.eq.s32.totalorder %s33, 1
      %p103 = por %p101, %p102
      %p104 = scmp.ne.s32.totalorder %s93, %s94
      %p105 = scmp.eq.s32.totalorder %s33, 0
      %p106 = por %p104, %p105
      %p107 = scmp.ne.s32.totalorder %s93, %s94
      %p108 = scmp.eq.s32.totalorder %s34, 1
      %p109 = por %p107, %p108
      %p111 = scmp.ne.s32.totalorder %s94, %s110
      %p112 = scmp.eq.s32.totalorder %s34, 0
      %p113 = por %p111, %p112
      %s115 = sadd.s32 %s114, 1
      %p118 = scmp.eq.s32.totalorder %s28, 1
      %p119 = scmp.ne.s32.totalorder %s114, %s116
      %p120 = scmp.eq.s32.totalorder %s28, 0
      %p121 = por %p119, %p120
      %p122 = scmp.ne.s32.totalorder %s114, %s116
      %p123 = scmp.eq.s32.totalorder %s33, 1
      %p124 = por %p122, %p123
      %p125 = scmp.ne.s32.totalorder %s116, %s117
      %p126 = scmp.eq.s32.totalorder %s33, 0
      %p127 = por %p125, %p126
      %p128 = scmp.ne.s32.totalorder %s116, %s117
      %p129 = scmp.eq.s32.totalorder %s34, 1
      %p130 = por %p128, %p129
      %p132 = scmp.ne.s32.totalorder %s117, %s131
      %p133 = scmp.eq.s32.totalorder %s34, 0
      %p134 = por %p132, %p133
      %s136 = sadd.s32 %s135, 1
      %p139 = scmp.eq.s32.totalorder %s28, 1
      %p140 = scmp.ne.s32.totalorder %s135, %s137
      %p141 = scmp.eq.s32.totalorder %s28, 0
      %p142 = por %p140, %p141
      %p143 = scmp.ne.s32.totalorder %s135, %s137
      %p144 = scmp.eq.s32.totalorder %s33, 1
      %p145 = por %p143, %p144
      %p146 = scmp.ne.s32.totalorder %s137, %s138
      %p147 = scmp.eq.s32.totalorder %s33, 0
      %p148 = por %p146, %p147
      %p149 = scmp.ne.s32.totalorder %s137, %s138
      %p150 = scmp.eq.s32.totalorder %s34, 1
      %p151 = por %p149, %p150
      %p153 = scmp.ne.s32.totalorder %s138, %s152
      %p154 = scmp.eq.s32.totalorder %s34, 0
      %p155 = por %p153, %p154
      %s157 = sadd.s32 %s156, 1
      %p160 = scmp.eq.s32.totalorder %s28, 1
      %p161 = scmp.ne.s32.totalorder %s156, %s158
      %p162 = scmp.eq.s32.totalorder %s28, 0
      %p163 = por %p161, %p162
      %p164 = scmp.ne.s32.totalorder %s156, %s158
      %p165 = scmp.eq.s32.totalorder %s33, 1
      %p166 = por %p164, %p165
      %p167 = scmp.ne.s32.totalorder %s158, %s159
      %p168 = scmp.eq.s32.totalorder %s33, 0
      %p169 = por %p167, %p168
      %p170 = scmp.ne.s32.totalorder %s158, %s159
      %p171 = scmp.eq.s32.totalorder %s34, 1
      %p172 = por %p170, %p171
      %p174 = scmp.ne.s32.totalorder %s159, %s173
      %p175 = scmp.eq.s32.totalorder %s34, 0
      %p176 = por %p174, %p175
      %s178 = sadd.s32 %s177, 1
      %p181 = scmp.eq.s32.totalorder %s28, 1
      %p182 = scmp.ne.s32.totalorder %s177, %s179
      %p183 = scmp.eq.s32.totalorder %s28, 0
      %p184 = por %p182, %p183
      %p185 = scmp.ne.s32.totalorder %s177, %s179
      %p186 = scmp.eq.s32.totalorder %s33, 1
      %p187 = por %p185, %p186
      %p188 = scmp.ne.s32.totalorder %s179, %s180
      %p189 = scmp.eq.s32.totalorder %s33, 0
      %p190 = por %p188, %p189
      %p191 = scmp.ne.s32.totalorder %s179, %s180
      %p192 = scmp.eq.s32.totalorder %s34, 1
      %p193 = por %p191, %p192
      %p195 = scmp.ne.s32.totalorder %s180, %s194
      %p196 = scmp.eq.s32.totalorder %s34, 0
      %p197 = por %p195, %p196
      %s199 = sadd.s32 %s198, 1
      %p202 = scmp.eq.s32.totalorder %s28, 1
      %p203 = scmp.ne.s32.totalorder %s198, %s200
      %p204 = scmp.eq.s32.totalorder %s28, 0
      %p205 = por %p203, %p204
      %p206 = scmp.ne.s32.totalorder %s198, %s200
      %p207 = scmp.eq.s32.totalorder %s33, 1
      %p208 = por %p206, %p207
      %p209 = scmp.ne.s32.totalorder %s200, %s201
      %p210 = scmp.eq.s32.totalorder %s33, 0
      %p211 = por %p209, %p210
      %p212 = scmp.ne.s32.totalorder %s200, %s201
      %p213 = scmp.eq.s32.totalorder %s34, 1
      %p214 = por %p212, %p213
      %p216 = scmp.ne.s32.totalorder %s201, %s215
      %p217 = scmp.eq.s32.totalorder %s34, 0
      %p218 = por %p216, %p217
      %s220 = sadd.s32 %s219, 1
      %p223 = scmp.eq.s32.totalorder %s28, 1
      %p224 = scmp.ne.s32.totalorder %s219, %s221
      %p225 = scmp.eq.s32.totalorder %s28, 0
      %p226 = por %p224, %p225
      %p227 = scmp.ne.s32.totalorder %s219, %s221
      %p228 = scmp.eq.s32.totalorder %s33, 1
      %p229 = por %p227, %p228
      %p230 = scmp.ne.s32.totalorder %s221, %s222
      %p231 = scmp.eq.s32.totalorder %s33, 0
      %p232 = por %p230, %p231
      %p233 = scmp.ne.s32.totalorder %s221, %s222
      %p234 = scmp.eq.s32.totalorder %s34, 1
      %p235 = por %p233, %p234
      %p237 = scmp.ne.s32.totalorder %s222, %s236
      %p238 = scmp.eq.s32.totalorder %s34, 0
      %p239 = por %p237, %p238
      %s241 = sadd.s32 %s240, 1
      %p244 = scmp.eq.s32.totalorder %s28, 1
      %p245 = scmp.ne.s32.totalorder %s240, %s242
      %p246 = scmp.eq.s32.totalorder %s28, 0
      %p247 = por %p245, %p246
      %p248 = scmp.ne.s32.totalorder %s240, %s242
      %p249 = scmp.eq.s32.totalorder %s33, 1
      %p250 = por %p248, %p249
      %p251 = scmp.ne.s32.totalorder %s242, %s243
      %p252 = scmp.eq.s32.totalorder %s33, 0
      %p253 = por %p251, %p252
      %p254 = scmp.ne.s32.totalorder %s242, %s243
      %p255 = scmp.eq.s32.totalorder %s34, 1
      %p256 = por %p254, %p255
      %p258 = scmp.ne.s32.totalorder %s243, %s257
      %p259 = scmp.eq.s32.totalorder %s34, 0
      %p260 = por %p258, %p259
      %s262 = sadd.s32 %s261, 1
      %p265 = scmp.eq.s32.totalorder %s28, 1
      %p266 = scmp.ne.s32.totalorder %s261, %s263
      %p267 = scmp.eq.s32.totalorder %s28, 0
      %p268 = por %p266, %p267
      %p269 = scmp.ne.s32.totalorder %s261, %s263
      %p270 = scmp.eq.s32.totalorder %s33, 1
      %p271 = por %p269, %p270
      %p272 = scmp.ne.s32.totalorder %s263, %s264
      %p273 = scmp.eq.s32.totalorder %s33, 0
      %p274 = por %p272, %p273
      %p275 = scmp.ne.s32.totalorder %s263, %s264
      %p276 = scmp.eq.s32.totalorder %s34, 1
      %p277 = por %p275, %p276
      %p279 = scmp.ne.s32.totalorder %s264, %s278
      %p280 = scmp.eq.s32.totalorder %s34, 0
      %p281 = por %p279, %p280
      %s282 = ssub.s32 %s28, %s35
      %p283 = scmp.eq.s32.totalorder %s282, 0
      %s285 = sadd.s32 %s284, 1
      %s286 = scalar_select %p283, %s284, %s285
      %p289 = pneg %p283
      %p290 = scmp.eq.s32.totalorder %s28, 1
      %p291 = por %p289, %p290
      %p292 = scmp.ne.s32.totalorder %s284, %s287
      %p293 = scmp.eq.s32.totalorder %s28, 0
      %p294 = por %p292, %p293
      %p295 = scmp.ne.s32.totalorder %s284, %s287
      %p296 = scmp.eq.s32.totalorder %s33, 1
      %p297 = por %p295, %p296
      %p298 = scmp.ne.s32.totalorder %s287, %s288
      %p299 = scmp.eq.s32.totalorder %s33, 0
      %p300 = por %p298, %p299
      %p301 = scmp.ne.s32.totalorder %s287, %s288
      %p302 = scmp.eq.s32.totalorder %s34, 1
      %p303 = por %p301, %p302
      %p305 = scmp.ne.s32.totalorder %s288, %s304
      %p306 = scmp.eq.s32.totalorder %s34, 0
      %p307 = por %p305, %p306
      %p308 = scmp.le.s32.totalorder 1, %s28
      %p309 = scmp.lt.s32.totalorder %s28, 3
      %p310 = pnand %p308, %p309
      %p311 = pneg %p310
      // Predicated region
      $region9: #{tpu_custom_call.1} parent=5 // pred_check
        _
      $region10: #{tpu_custom_call.1} parent=5 // pred_check_branch
        %313 = sbr.rel (%p310) target = $region12
      $region11: #{tpu_custom_call.1} parent=5 // pred_region
        %s314 = ssub.s32 %s28, 1
        // Predicated region
        $region13: #{tpu_custom_call.1} parent=11 // pred_check
          %p315 = pneg %p127
        $region14: #{tpu_custom_call.1} parent=11 // pred_check_branch
          %317 = sbr.rel (%p315) target = $region16
        $region15: #{tpu_custom_call.1} parent=11 // pred_region
          %s319 = ssub.s32 2048, 2048
          %320 = vsyncadd [#allocation9], %s319
          %s321 = sshll.u32 [#allocation8], 4
          %s322 = int_to_ptr.vmem [resolvable:$true] %s321
          %327 = dma.hbm_to_vmem [thread:$0]  %s3, 2048, %s322, [#allocation9], 128, 128, 8
        $region16: #{tpu_custom_call.1} parent=11 // pred_fallthru
          _
        // Predicated region
        $region17: #{tpu_custom_call.1} parent=11 // pred_check
          %p328 = pneg %p148
        $region18: #{tpu_custom_call.1} parent=11 // pred_check_branch
          %330 = sbr.rel (%p328) target = $region20
        $region19: #{tpu_custom_call.1} parent=11 // pred_region
          _
        $region20: #{tpu_custom_call.1} parent=11 // pred_fallthru
          _
        // Predicated region
        $region21: #{tpu_custom_call.1} parent=11 // pred_check
          %p331 = pneg %p169
        $region22: #{tpu_custom_call.1} parent=11 // pred_check_branch
          %333 = sbr.rel (%p331) target = $region24
        $region23: #{tpu_custom_call.1} parent=11 // pred_region
          %s335 = ssub.s32 2048, 2048
          %336 = vsyncadd [#allocation9], %s335
          %s337 = sshll.u32 [#allocation10], 4
          %s338 = int_to_ptr.vmem [resolvable:$true] %s337
          %343 = dma.hbm_to_vmem [thread:$0]  %s5, 2048, %s338, [#allocation9], 128, 128, 8
        $region24: #{tpu_custom_call.1} parent=11 // pred_fallthru
          _
        // Predicated region
        $region25: #{tpu_custom_call.1} parent=11 // pred_check
          %p344 = pneg %p190
        $region26: #{tpu_custom_call.1} parent=11 // pred_check_branch
          %346 = sbr.rel (%p344) target = $region28
        $region27: #{tpu_custom_call.1} parent=11 // pred_region
          _
        $region28: #{tpu_custom_call.1} parent=11 // pred_fallthru
          _
        // Predicated region
        $region29: #{tpu_custom_call.1} parent=11 // pred_check
          %p347 = pneg %p211
        $region30: #{tpu_custom_call.1} parent=11 // pred_check_branch
          %349 = sbr.rel (%p347) target = $region32
        $region31: #{tpu_custom_call.1} parent=11 // pred_region
          %s351 = ssub.s32 2048, 2048
          %352 = vsyncadd [#allocation12], %s351
          %s353 = sshll.u32 [#allocation11], 4
          %s354 = int_to_ptr.vmem [resolvable:$true] %s353
          %359 = dma.hbm_to_vmem [thread:$0]  %s7, 2048, %s354, [#allocation12], 128, 128, 8
        $region32: #{tpu_custom_call.1} parent=11 // pred_fallthru
          _
        // Predicated region
        $region33: #{tpu_custom_call.1} parent=11 // pred_check
          %p360 = pneg %p232
        $region34: #{tpu_custom_call.1} parent=11 // pred_check_branch
          %362 = sbr.rel (%p360) target = $region36
        $region35: #{tpu_custom_call.1} parent=11 // pred_region
          _
        $region36: #{tpu_custom_call.1} parent=11 // pred_fallthru
          _
        // Predicated region
        $region37: #{tpu_custom_call.1} parent=11 // pred_check
          %p363 = pneg %p253
        $region38: #{tpu_custom_call.1} parent=11 // pred_check_branch
          %365 = sbr.rel (%p363) target = $region40
        $region39: #{tpu_custom_call.1} parent=11 // pred_region
          %s367 = ssub.s32 2048, 2048
          %368 = vsyncadd [#allocation12], %s367
          %s369 = sshll.u32 [#allocation13], 4
          %s370 = int_to_ptr.vmem [resolvable:$true] %s369
          %375 = dma.hbm_to_vmem [thread:$0]  %s9, 2048, %s370, [#allocation12], 128, 128, 8
        $region40: #{tpu_custom_call.1} parent=11 // pred_fallthru
          _
        // Predicated region
        $region41: #{tpu_custom_call.1} parent=11 // pred_check
          %p376 = pneg %p274
        $region42: #{tpu_custom_call.1} parent=11 // pred_check_branch
          %378 = sbr.rel (%p376) target = $region44
        $region43: #{tpu_custom_call.1} parent=11 // pred_region
          _
        $region44: #{tpu_custom_call.1} parent=11 // pred_fallthru
          _
      $region12: #{tpu_custom_call.1} parent=5 // pred_fallthru
        _
      %p379 = scmp.lt.s32.totalorder %s28, 2
      // Predicated region
      $region45: #{tpu_custom_call.1} parent=5 // pred_check
        %p380 = pneg %p379
      $region46: #{tpu_custom_call.1} parent=5 // pred_check_branch
        %382 = sbr.rel (%p380) target = $region48
      $region47: #{tpu_custom_call.1} parent=5 // pred_region
        // Predicated region
        $region49: #{tpu_custom_call.1} parent=47 // pred_check
          %p383 = pneg %p48
        $region50: #{tpu_custom_call.1} parent=47 // pred_check_branch
          %385 = sbr.rel (%p383) target = $region52
        $region51: #{tpu_custom_call.1} parent=47 // pred_region
          %s386 = sand.u32 %s38, 1
          %s387 = scalar_lea.sflag [#allocation3], %s386
          %s388 = sand.u32 %s38, 1
          %s389 = smul.addr %s388, 8
          %s390 = scalar_lea.vmem [#allocation2], %s389
          %s392 = ssub.s32 128, 128
          %393 = vsyncadd %s387, %s392
          %s394 = smul.addr %s28, 128
          %s395 = scalar_lea.hbm %s0, %s394
          %s397 = sshll.u32 %s390, 4
          %s398 = int_to_ptr.vmem [resolvable:$true] %s397
          %400 = dma.hbm_to_vmem [thread:$0]  %s395, 128, %s398, %s387
        $region52: #{tpu_custom_call.1} parent=47 // pred_fallthru
          _
        // Predicated region
        $region53: #{tpu_custom_call.1} parent=47 // pred_check
          %p401 = pneg %p74
        $region54: #{tpu_custom_call.1} parent=47 // pred_check_branch
          %403 = sbr.rel (%p401) target = $region56
        $region55: #{tpu_custom_call.1} parent=47 // pred_region
          %s404 = sand.u32 %s28, 1
          %s405 = scalar_lea.sflag [#allocation6], %s404
          %s406 = sand.u32 %s64, 1
          %s407 = smul.addr %s406, 8
          %s408 = scalar_lea.vmem [#allocation5], %s407
          %s410 = ssub.s32 128, 128
          %411 = vsyncadd %s405, %s410
          %s412 = smul.addr %s28, 128
          %s413 = scalar_lea.hbm %s1, %s412
          %s415 = sshll.u32 %s408, 4
          %s416 = int_to_ptr.vmem [resolvable:$true] %s415
          %418 = dma.hbm_to_vmem [thread:$0]  %s413, 128, %s416, %s405
        $region56: #{tpu_custom_call.1} parent=47 // pred_fallthru
          _
        // Predicated region
        $region57: #{tpu_custom_call.1} parent=47 // pred_check
          %p419 = pneg %p100
        $region58: #{tpu_custom_call.1} parent=47 // pred_check_branch
          %421 = sbr.rel (%p419) target = $region60
        $region59: #{tpu_custom_call.1} parent=47 // pred_region
          %s422 = sand.u32 %s28, 1
          %s423 = scalar_lea.sflag [#allocation6], %s422
          %s424 = sand.u32 %s90, 1
          %s425 = smul.addr %s424, 8
          %s426 = scalar_lea.vmem [#allocation7], %s425
          %s428 = ssub.s32 128, 128
          %429 = vsyncadd %s423, %s428
          %s430 = smul.addr %s28, 128
          %s431 = scalar_lea.hbm %s2, %s430
          %s433 = sshll.u32 %s426, 4
          %s434 = int_to_ptr.vmem [resolvable:$true] %s433
          %436 = dma.hbm_to_vmem [thread:$0]  %s431, 128, %s434, %s423
        $region60: #{tpu_custom_call.1} parent=47 // pred_fallthru
          _
      $region48: #{tpu_custom_call.1} parent=5 // pred_fallthru
        _
      %p437 = scmp.le.s32.totalorder 1, %s28
      %p438 = scmp.lt.s32.totalorder %s28, 3
      %p439 = pnand %p437, %p438
      %p440 = pneg %p439
      // Predicated region
      $region61: #{tpu_custom_call.1} parent=5 // pred_check
        _
      $region62: #{tpu_custom_call.1} parent=5 // pred_check_branch
        %442 = sbr.rel (%p439) target = $region64
      $region63: #{tpu_custom_call.1} parent=5 // pred_region
        %s443 = ssub.s32 %s28, 1
        %s444 = sand.u32 %s41, 1
        %s445 = scalar_lea.sflag [#allocation3], %s444
        %s446 = sand.u32 %s41, 1
        %s447 = smul.addr %s446, 8
        %s448 = scalar_lea.vmem [#allocation2], %s447
        // Predicated region
        $region65: #{tpu_custom_call.1} parent=63 // pred_check
          %p449 = pneg %p54
        $region66: #{tpu_custom_call.1} parent=63 // pred_check_branch
          %451 = sbr.rel (%p449) target = $region68
        $region67: #{tpu_custom_call.1} parent=63 // pred_region
          %452 = dma.done %s445, 128
        $region68: #{tpu_custom_call.1} parent=63 // pred_fallthru
          _
        %s453 = sand.u32 %s33, 1
        %s454 = scalar_lea.sflag [#allocation6], %s453
        %s455 = sand.u32 %s67, 1
        %s456 = smul.addr %s455, 8
        %s457 = scalar_lea.vmem [#allocation5], %s456
        // Predicated region
        $region69: #{tpu_custom_call.1} parent=63 // pred_check
          %p458 = pneg %p80
        $region70: #{tpu_custom_call.1} parent=63 // pred_check_branch
          %460 = sbr.rel (%p458) target = $region72
        $region71: #{tpu_custom_call.1} parent=63 // pred_region
          %461 = dma.done %s454, 128
        $region72: #{tpu_custom_call.1} parent=63 // pred_fallthru
          _
        %s462 = sand.u32 %s33, 1
        %s463 = scalar_lea.sflag [#allocation6], %s462
        %s464 = sand.u32 %s93, 1
        %s465 = smul.addr %s464, 8
        %s466 = scalar_lea.vmem [#allocation7], %s465
        // Predicated region
        $region73: #{tpu_custom_call.1} parent=63 // pred_check
          %p467 = pneg %p106
        $region74: #{tpu_custom_call.1} parent=63 // pred_check_branch
          %469 = sbr.rel (%p467) target = $region76
        $region75: #{tpu_custom_call.1} parent=63 // pred_region
          %470 = dma.done %s463, 128
        $region76: #{tpu_custom_call.1} parent=63 // pred_fallthru
          _
        // Predicated region
        $region77: #{tpu_custom_call.1} parent=63 // pred_check
          %p471 = pneg %p127
        $region78: #{tpu_custom_call.1} parent=63 // pred_check_branch
          %473 = sbr.rel (%p471) target = $region80
        $region79: #{tpu_custom_call.1} parent=63 // pred_region
          %474 = dma.done [#allocation9], 2048
        $region80: #{tpu_custom_call.1} parent=63 // pred_fallthru
          _
        // Predicated region
        $region81: #{tpu_custom_call.1} parent=63 // pred_check
          %p475 = pneg %p169
        $region82: #{tpu_custom_call.1} parent=63 // pred_check_branch
          %477 = sbr.rel (%p475) target = $region84
        $region83: #{tpu_custom_call.1} parent=63 // pred_region
          %478 = dma.done [#allocation9], 2048
        $region84: #{tpu_custom_call.1} parent=63 // pred_fallthru
          _
        // Predicated region
        $region85: #{tpu_custom_call.1} parent=63 // pred_check
          %p479 = pneg %p211
        $region86: #{tpu_custom_call.1} parent=63 // pred_check_branch
          %481 = sbr.rel (%p479) target = $region88
        $region87: #{tpu_custom_call.1} parent=63 // pred_region
          %482 = dma.done [#allocation12], 2048
        $region88: #{tpu_custom_call.1} parent=63 // pred_fallthru
          _
        // Predicated region
        $region89: #{tpu_custom_call.1} parent=63 // pred_check
          %p483 = pneg %p253
        $region90: #{tpu_custom_call.1} parent=63 // pred_check_branch
          %485 = sbr.rel (%p483) target = $region92
        $region91: #{tpu_custom_call.1} parent=63 // pred_region
          %486 = dma.done [#allocation12], 2048
        $region92: #{tpu_custom_call.1} parent=63 // pred_fallthru
          _
        %s487 = sand.u32 %s41, 1
        %s488 = scalar_lea.sflag [#allocation3], %s487
        %s489 = sand.u32 %s41, 1
        %s490 = smul.addr %s489, 8
        %s491 = scalar_lea.vmem [#allocation2], %s490
        %p492 = pneg %p54
        %p493 = pneg %p51
        %s494 = sand.u32 %s33, 1
        %s495 = scalar_lea.sflag [#allocation6], %s494
        %s496 = sand.u32 %s67, 1
        %s497 = smul.addr %s496, 8
        %s498 = scalar_lea.vmem [#allocation5], %s497
        %p499 = pneg %p80
        %p500 = pneg %p77
        %s501 = sand.u32 %s33, 1
        %s502 = scalar_lea.sflag [#allocation6], %s501
        %s503 = sand.u32 %s93, 1
        %s504 = smul.addr %s503, 8
        %s505 = scalar_lea.vmem [#allocation7], %s504
        %p506 = pneg %p106
        %p507 = pneg %p103
        %p508 = pneg %p127
        %p509 = pneg %p124
        %p510 = pneg %p148
        %p511 = pneg %p145
        %p512 = pneg %p169
        %p513 = pneg %p166
        %p514 = pneg %p190
        %p515 = pneg %p187
        %p516 = pneg %p211
        %p517 = pneg %p208
        %p518 = pneg %p232
        %p519 = pneg %p229
        %p520 = pneg %p253
        %p521 = pneg %p250
        %p522 = pneg %p274
        %p523 = pneg %p271
        %p524 = pneg %p300
        %p525 = pneg %p297
        %s526 = sand.u32 %s287, 1
        %s527 = scalar_lea.sflag [#allocation4], %s526
        %s528 = sand.u32 %s287, 1
        %s529 = smul.addr %s528, 8
        %s530 = scalar_lea.vmem [#allocation14], %s529
        %v531 = vld [vmem:[%s448] sm:$0xff]
        %v532 = vld [vmem:[%s457] sm:$0xff]
        %v533 = vld [vmem:[%s466] sm:$0xff]
        %v534 = vld [vmem:[#allocation8] sm:$0xff]
        %v535 = vld [vmem:[#allocation8 + $0x8] sm:$0xff]
        %v536 = vld [vmem:[#allocation8 + $0x10] sm:$0xff]
        %v537 = vld [vmem:[#allocation8 + $0x18] sm:$0xff]
        %v538 = vld [vmem:[#allocation8 + $0x20] sm:$0xff]
        %v539 = vld [vmem:[#allocation8 + $0x28] sm:$0xff]
        %v540 = vld [vmem:[#allocation8 + $0x30] sm:$0xff]
        %v541 = vld [vmem:[#allocation8 + $0x38] sm:$0xff]
        %v542 = vld [vmem:[#allocation8 + $0x40] sm:$0xff]
        %v543 = vld [vmem:[#allocation8 + $0x48] sm:$0xff]
        %v544 = vld [vmem:[#allocation8 + $0x50] sm:$0xff]
        %v545 = vld [vmem:[#allocation8 + $0x58] sm:$0xff]
        %v546 = vld [vmem:[#allocation8 + $0x60] sm:$0xff]
        %v547 = vld [vmem:[#allocation8 + $0x68] sm:$0xff]
        %v548 = vld [vmem:[#allocation8 + $0x70] sm:$0xff]
        %v549 = vld [vmem:[#allocation8 + $0x78] sm:$0xff]
        %v550 = vld [vmem:[%s4] sm:$0x1]
        %v552 = vlaneseq
        %v553 = vshrl.u32 %v552, 7
        %v554 = vsub.s32 0, %v553
        %v555 = vrot.slane %v550, %v554
        %557 = vmatprep.subr.mxu0 0.0
        %558 = vmatpush1.msra.mxu0 %v534
        %559 = vmatprep.subr.mxu0 0.0
        %560 = vmatpush1.msra.mxu0 %v535
        %561 = vmatprep.subr.mxu0 0.0
        %562 = vmatpush1.msra.mxu0 %v536
        %563 = vmatprep.subr.mxu0 0.0
        %564 = vmatpush1.msra.mxu0 %v537
        %565 = vmatprep.subr.mxu0 0.0
        %566 = vmatpush1.msra.mxu0 %v538
        %567 = vmatprep.subr.mxu0 0.0
        %568 = vmatpush1.msra.mxu0 %v539
        %569 = vmatprep.subr.mxu0 0.0
        %570 = vmatpush1.msra.mxu0 %v540
        %571 = vmatprep.subr.mxu0 0.0
        %572 = vmatpush1.msra.mxu0 %v541
        %573 = vmatprep.subr.mxu0 0.0
        %574 = vmatpush1.msra.mxu0 %v542
        %575 = vmatprep.subr.mxu0 0.0
        %576 = vmatpush1.msra.mxu0 %v543
        %577 = vmatprep.subr.mxu0 0.0
        %578 = vmatpush1.msra.mxu0 %v544
        %579 = vmatprep.subr.mxu0 0.0
        %580 = vmatpush1.msra.mxu0 %v545
        %581 = vmatprep.subr.mxu0 0.0
        %582 = vmatpush1.msra.mxu0 %v546
        %583 = vmatprep.subr.mxu0 0.0
        %584 = vmatpush1.msra.mxu0 %v547
        %585 = vmatprep.subr.mxu0 0.0
        %586 = vmatpush1.msra.mxu0 %v548
        %587 = vmatprep.subr.mxu0 0.0
        %588 = vmatpush1.msra.mxu0 %v549
        %589 = vmatprep.subr.mxu0 0.0
        %590 = vmatpush1.msra.mxu0 0.0
        %591 = vmatprep.subr.mxu0 0.0
        %592 = vmatpush1.msra.mxu0 0.0
        %593 = vmatprep.subr.mxu0 0.0
        %594 = vmatpush1.msra.mxu0 0.0
        %595 = vmatprep.subr.mxu0 0.0
        %596 = vmatpush1.msra.mxu0 0.0
        %597 = vmatprep.subr.mxu0 0.0
        %598 = vmatpush1.msra.mxu0 0.0
        %599 = vmatprep.subr.mxu0 0.0
        %600 = vmatpush1.msra.mxu0 0.0
        %601 = vmatprep.subr.mxu0 0.0
        %602 = vmatpush1.msra.mxu0 0.0
        %603 = vmatprep.subr.mxu0 0.0
        %604 = vmatpush1.msra.mxu0 0.0
        %605 = vmatprep.subr.mxu0 0.0
        %606 = vmatpush1.msra.mxu0 0.0
        %607 = vmatprep.subr.mxu0 0.0
        %608 = vmatpush1.msra.mxu0 0.0
        %609 = vmatprep.subr.mxu0 0.0
        %610 = vmatpush1.msra.mxu0 0.0
        %611 = vmatprep.subr.mxu0 0.0
        %612 = vmatpush1.msra.mxu0 0.0
        %613 = vmatprep.subr.mxu0 0.0
        %614 = vmatpush1.msra.mxu0 0.0
        %615 = vmatprep.subr.mxu0 0.0
        %616 = vmatpush1.msra.mxu0 0.0
        %617 = vmatprep.subr.mxu0 0.0
        %618 = vmatpush1.msra.mxu0 0.0
        %619 = vmatprep.subr.mxu0 0.0
        %620 = vmatpush1.msra.mxu0 0.0
        %621 = vmatprep.mubr.f32.mxu0 0.0
        %622 = vmatmul.mubr.f32.gmra.mrb[0].mxu0 %v531
        %v623 = vpop.f32.mrb[0].mxu0
        %v624 = vadd.f32 %v555, %v623
        %v625 = vpop.f32.mrb[0].mxu0
        %626 = vdwg.mxu0
        %v627 = vld [vmem:[#allocation10] sm:$0xff]
        %v628 = vld [vmem:[#allocation10 + $0x8] sm:$0xff]
        %v629 = vld [vmem:[#allocation10 + $0x10] sm:$0xff]
        %v630 = vld [vmem:[#allocation10 + $0x18] sm:$0xff]
        %v631 = vld [vmem:[#allocation10 + $0x20] sm:$0xff]
        %v632 = vld [vmem:[#allocation10 + $0x28] sm:$0xff]
        %v633 = vld [vmem:[#allocation10 + $0x30] sm:$0xff]
        %v634 = vld [vmem:[#allocation10 + $0x38] sm:$0xff]
        %v635 = vld [vmem:[#allocation10 + $0x40] sm:$0xff]
        %v636 = vld [vmem:[#allocation10 + $0x48] sm:$0xff]
        %v637 = vld [vmem:[#allocation10 + $0x50] sm:$0xff]
        %v638 = vld [vmem:[#allocation10 + $0x58] sm:$0xff]
        %v639 = vld [vmem:[#allocation10 + $0x60] sm:$0xff]
        %v640 = vld [vmem:[#allocation10 + $0x68] sm:$0xff]
        %v641 = vld [vmem:[#allocation10 + $0x70] sm:$0xff]
        %v642 = vld [vmem:[#allocation10 + $0x78] sm:$0xff]
        %v643 = vld [vmem:[%s6] sm:$0x1]
        %v645 = vlaneseq
        %v646 = vshrl.u32 %v645, 7
        %v647 = vsub.s32 0, %v646
        %v648 = vrot.slane %v643, %v647
        %650 = vmatprep.subr.mxu0 0.0
        %651 = vmatpush1.msra.mxu0 %v627
        %652 = vmatprep.subr.mxu0 0.0
        %653 = vmatpush1.msra.mxu0 %v628
        %654 = vmatprep.subr.mxu0 0.0
        %655 = vmatpush1.msra.mxu0 %v629
        %656 = vmatprep.subr.mxu0 0.0
        %657 = vmatpush1.msra.mxu0 %v630
        %658 = vmatprep.subr.mxu0 0.0
        %659 = vmatpush1.msra.mxu0 %v631
        %660 = vmatprep.subr.mxu0 0.0
        %661 = vmatpush1.msra.mxu0 %v632
        %662 = vmatprep.subr.mxu0 0.0
        %663 = vmatpush1.msra.mxu0 %v633
        %664 = vmatprep.subr.mxu0 0.0
        %665 = vmatpush1.msra.mxu0 %v634
        %666 = vmatprep.subr.mxu0 0.0
        %667 = vmatpush1.msra.mxu0 %v635
        %668 = vmatprep.subr.mxu0 0.0
        %669 = vmatpush1.msra.mxu0 %v636
        %670 = vmatprep.subr.mxu0 0.0
        %671 = vmatpush1.msra.mxu0 %v637
        %672 = vmatprep.subr.mxu0 0.0
        %673 = vmatpush1.msra.mxu0 %v638
        %674 = vmatprep.subr.mxu0 0.0
        %675 = vmatpush1.msra.mxu0 %v639
        %676 = vmatprep.subr.mxu0 0.0
        %677 = vmatpush1.msra.mxu0 %v640
        %678 = vmatprep.subr.mxu0 0.0
        %679 = vmatpush1.msra.mxu0 %v641
        %680 = vmatprep.subr.mxu0 0.0
        %681 = vmatpush1.msra.mxu0 %v642
        %682 = vmatprep.subr.mxu0 0.0
        %683 = vmatpush1.msra.mxu0 0.0
        %684 = vmatprep.subr.mxu0 0.0
        %685 = vmatpush1.msra.mxu0 0.0
        %686 = vmatprep.subr.mxu0 0.0
        %687 = vmatpush1.msra.mxu0 0.0
        %688 = vmatprep.subr.mxu0 0.0
        %689 = vmatpush1.msra.mxu0 0.0
        %690 = vmatprep.subr.mxu0 0.0
        %691 = vmatpush1.msra.mxu0 0.0
        %692 = vmatprep.subr.mxu0 0.0
        %693 = vmatpush1.msra.mxu0 0.0
        %694 = vmatprep.subr.mxu0 0.0
        %695 = vmatpush1.msra.mxu0 0.0
        %696 = vmatprep.subr.mxu0 0.0
        %697 = vmatpush1.msra.mxu0 0.0
        %698 = vmatprep.subr.mxu0 0.0
        %699 = vmatpush1.msra.mxu0 0.0
        %700 = vmatprep.subr.mxu0 0.0
        %701 = vmatpush1.msra.mxu0 0.0
        %702 = vmatprep.subr.mxu0 0.0
        %703 = vmatpush1.msra.mxu0 0.0
        %704 = vmatprep.subr.mxu0 0.0
        %705 = vmatpush1.msra.mxu0 0.0
        %706 = vmatprep.subr.mxu0 0.0
        %707 = vmatpush1.msra.mxu0 0.0
        %708 = vmatprep.subr.mxu0 0.0
        %709 = vmatpush1.msra.mxu0 0.0
        %710 = vmatprep.subr.mxu0 0.0
        %711 = vmatpush1.msra.mxu0 0.0
        %712 = vmatprep.subr.mxu0 0.0
        %713 = vmatpush1.msra.mxu0 0.0
        %714 = vmatprep.mubr.f32.mxu0 0.0
        %715 = vmatmul.mubr.f32.gmra.mrb[0].mxu0 %v532
        %v716 = vpop.f32.mrb[0].mxu0
        %v717 = vadd.f32 %v648, %v716
        %v718 = vpop.f32.mrb[0].mxu0
        %719 = vdwg.mxu0
        %v720 = vld [vmem:[#allocation11] sm:$0xff]
        %v721 = vld [vmem:[#allocation11 + $0x8] sm:$0xff]
        %v722 = vld [vmem:[#allocation11 + $0x10] sm:$0xff]
        %v723 = vld [vmem:[#allocation11 + $0x18] sm:$0xff]
        %v724 = vld [vmem:[#allocation11 + $0x20] sm:$0xff]
        %v725 = vld [vmem:[#allocation11 + $0x28] sm:$0xff]
        %v726 = vld [vmem:[#allocation11 + $0x30] sm:$0xff]
        %v727 = vld [vmem:[#allocation11 + $0x38] sm:$0xff]
        %v728 = vld [vmem:[#allocation11 + $0x40] sm:$0xff]
        %v729 = vld [vmem:[#allocation11 + $0x48] sm:$0xff]
        %v730 = vld [vmem:[#allocation11 + $0x50] sm:$0xff]
        %v731 = vld [vmem:[#allocation11 + $0x58] sm:$0xff]
        %v732 = vld [vmem:[#allocation11 + $0x60] sm:$0xff]
        %v733 = vld [vmem:[#allocation11 + $0x68] sm:$0xff]
        %v734 = vld [vmem:[#allocation11 + $0x70] sm:$0xff]
        %v735 = vld [vmem:[#allocation11 + $0x78] sm:$0xff]
        %v736 = vld [vmem:[%s8] sm:$0x1]
        %v738 = vlaneseq
        %v739 = vshrl.u32 %v738, 7
        %v740 = vsub.s32 0, %v739
        %v741 = vrot.slane %v736, %v740
        %743 = vmatprep.subr.mxu0 0.0
        %744 = vmatpush1.msra.mxu0 %v720
        %745 = vmatprep.subr.mxu0 0.0
        %746 = vmatpush1.msra.mxu0 %v721
        %747 = vmatprep.subr.mxu0 0.0
        %748 = vmatpush1.msra.mxu0 %v722
        %749 = vmatprep.subr.mxu0 0.0
        %750 = vmatpush1.msra.mxu0 %v723
        %751 = vmatprep.subr.mxu0 0.0
        %752 = vmatpush1.msra.mxu0 %v724
        %753 = vmatprep.subr.mxu0 0.0
        %754 = vmatpush1.msra.mxu0 %v725
        %755 = vmatprep.subr.mxu0 0.0
        %756 = vmatpush1.msra.mxu0 %v726
        %757 = vmatprep.subr.mxu0 0.0
        %758 = vmatpush1.msra.mxu0 %v727
        %759 = vmatprep.subr.mxu0 0.0
        %760 = vmatpush1.msra.mxu0 %v728
        %761 = vmatprep.subr.mxu0 0.0
        %762 = vmatpush1.msra.mxu0 %v729
        %763 = vmatprep.subr.mxu0 0.0
        %764 = vmatpush1.msra.mxu0 %v730
        %765 = vmatprep.subr.mxu0 0.0
        %766 = vmatpush1.msra.mxu0 %v731
        %767 = vmatprep.subr.mxu0 0.0
        %768 = vmatpush1.msra.mxu0 %v732
        %769 = vmatprep.subr.mxu0 0.0
        %770 = vmatpush1.msra.mxu0 %v733
        %771 = vmatprep.subr.mxu0 0.0
        %772 = vmatpush1.msra.mxu0 %v734
        %773 = vmatprep.subr.mxu0 0.0
        %774 = vmatpush1.msra.mxu0 %v735
        %775 = vmatprep.subr.mxu0 0.0
        %776 = vmatpush1.msra.mxu0 0.0
        %777 = vmatprep.subr.mxu0 0.0
        %778 = vmatpush1.msra.mxu0 0.0
        %779 = vmatprep.subr.mxu0 0.0
        %780 = vmatpush1.msra.mxu0 0.0
        %781 = vmatprep.subr.mxu0 0.0
        %782 = vmatpush1.msra.mxu0 0.0
        %783 = vmatprep.subr.mxu0 0.0
        %784 = vmatpush1.msra.mxu0 0.0
        %785 = vmatprep.subr.mxu0 0.0
        %786 = vmatpush1.msra.mxu0 0.0
        %787 = vmatprep.subr.mxu0 0.0
        %788 = vmatpush1.msra.mxu0 0.0
        %789 = vmatprep.subr.mxu0 0.0
        %790 = vmatpush1.msra.mxu0 0.0
        %791 = vmatprep.subr.mxu0 0.0
        %792 = vmatpush1.msra.mxu0 0.0
        %793 = vmatprep.subr.mxu0 0.0
        %794 = vmatpush1.msra.mxu0 0.0
        %795 = vmatprep.subr.mxu0 0.0
        %796 = vmatpush1.msra.mxu0 0.0
        %797 = vmatprep.subr.mxu0 0.0
        %798 = vmatpush1.msra.mxu0 0.0
        %799 = vmatprep.subr.mxu0 0.0
        %800 = vmatpush1.msra.mxu0 0.0
        %801 = vmatprep.subr.mxu0 0.0
        %802 = vmatpush1.msra.mxu0 0.0
        %803 = vmatprep.subr.mxu0 0.0
        %804 = vmatpush1.msra.mxu0 0.0
        %805 = vmatprep.subr.mxu0 0.0
        %806 = vmatpush1.msra.mxu0 0.0
        %807 = vmatprep.mubr.f32.mxu0 0.0
        %808 = vmatmul.mubr.f32.gmra.mrb[0].mxu0 %v533
        %v809 = vpop.f32.mrb[0].mxu0
        %v810 = vadd.f32 %v741, %v809
        %v811 = vpop.f32.mrb[0].mxu0
        %812 = vdwg.mxu0
        %vm813 = vcmask 64512
        %v815 = vsel %vm813, %v624, 0
        %v818 = vsel %vm813, %v717, 0
        %820 = vmatprep.subr.mxu0 0.0
        %821 = vmatpush1.xpose.msra.mxu0 %v818
        %822 = vmatprep.subr.mxu0 0.0
        %823 = vmatpush1.xpose.msra.mxu0 0.0
        %824 = vmatprep.subr.mxu0 0.0
        %825 = vmatpush1.xpose.msra.mxu0 0.0
        %826 = vmatprep.subr.mxu0 0.0
        %827 = vmatpush1.xpose.msra.mxu0 0.0
        %828 = vmatprep.subr.mxu0 0.0
        %829 = vmatpush1.xpose.msra.mxu0 0.0
        %830 = vmatprep.subr.mxu0 0.0
        %831 = vmatpush1.xpose.msra.mxu0 0.0
        %832 = vmatprep.subr.mxu0 0.0
        %833 = vmatpush1.xpose.msra.mxu0 0.0
        %834 = vmatprep.subr.mxu0 0.0
        %835 = vmatpush1.xpose.msra.mxu0 0.0
        %836 = vmatprep.subr.mxu0 0.0
        %837 = vmatpush1.xpose.msra.mxu0 0.0
        %838 = vmatprep.subr.mxu0 0.0
        %839 = vmatpush1.xpose.msra.mxu0 0.0
        %840 = vmatprep.subr.mxu0 0.0
        %841 = vmatpush1.xpose.msra.mxu0 0.0
        %842 = vmatprep.subr.mxu0 0.0
        %843 = vmatpush1.xpose.msra.mxu0 0.0
        %844 = vmatprep.subr.mxu0 0.0
        %845 = vmatpush1.xpose.msra.mxu0 0.0
        %846 = vmatprep.subr.mxu0 0.0
        %847 = vmatpush1.xpose.msra.mxu0 0.0
        %848 = vmatprep.subr.mxu0 0.0
        %849 = vmatpush1.xpose.msra.mxu0 0.0
        %850 = vmatprep.subr.mxu0 0.0
        %851 = vmatpush1.xpose.msra.mxu0 0.0
        %852 = vmatprep.subr.mxu0 0.0
        %853 = vmatpush1.xpose.msra.mxu0 0.0
        %854 = vmatprep.subr.mxu0 0.0
        %855 = vmatpush1.xpose.msra.mxu0 0.0
        %856 = vmatprep.subr.mxu0 0.0
        %857 = vmatpush1.xpose.msra.mxu0 0.0
        %858 = vmatprep.subr.mxu0 0.0
        %859 = vmatpush1.xpose.msra.mxu0 0.0
        %860 = vmatprep.subr.mxu0 0.0
        %861 = vmatpush1.xpose.msra.mxu0 0.0
        %862 = vmatprep.subr.mxu0 0.0
        %863 = vmatpush1.xpose.msra.mxu0 0.0
        %864 = vmatprep.subr.mxu0 0.0
        %865 = vmatpush1.xpose.msra.mxu0 0.0
        %866 = vmatprep.subr.mxu0 0.0
        %867 = vmatpush1.xpose.msra.mxu0 0.0
        %868 = vmatprep.subr.mxu0 0.0
        %869 = vmatpush1.xpose.msra.mxu0 0.0
        %870 = vmatprep.subr.mxu0 0.0
        %871 = vmatpush1.xpose.msra.mxu0 0.0
        %872 = vmatprep.subr.mxu0 0.0
        %873 = vmatpush1.xpose.msra.mxu0 0.0
        %874 = vmatprep.subr.mxu0 0.0
        %875 = vmatpush1.xpose.msra.mxu0 0.0
        %876 = vmatprep.subr.mxu0 0.0
        %877 = vmatpush1.xpose.msra.mxu0 0.0
        %878 = vmatprep.subr.mxu0 0.0
        %879 = vmatpush1.xpose.msra.mxu0 0.0
        %880 = vmatprep.subr.mxu0 0.0
        %881 = vmatpush1.xpose.msra.mxu0 0.0
        %882 = vmatprep.subr.mxu0 0.0
        %883 = vmatpush1.xpose.msra.mxu0 0.0
        %884 = vmatprep.mubr.f32.mxu0 0.0
        %885 = vmatmul.mubr.f32.gmra.mrb[0].mxu0 %v815
        %v886 = vpop.f32.mrb[0].mxu0
        %v887 = vadd.f32 0.0, %v886
        %v888 = vpop.f32.mrb[0].mxu0
        %889 = vdwg.mxu0
        %v890 = vmul.f32 %v887, 0.35355338
        %v891 = vsel %vm813, %v890, -inf
        %892 = vmax.xlane.f32.xlu0 %v891
        %v893 = vpop.xlane.xlu0 %892
        %v894 = vsub.f32 %v890, %v893
        %v895 = vmul.f32 %v894, 1.442695
        %v896 = vpow.pop %v895
        %v897 = vsel %vm813, %v896, 0.0
        %898 = vadd.xlane.f32.xlu0 %v897
        %v899 = vpop.xlane.xlu0 %898
        %v900 = vrcp.pop %v899
        %v901 = vmul.f32 %v896, %v900
        %v903 = vsel %vm813, %v901, 0
        %905 = vmatprep.subr.mxu0 0.0
        %906 = vmatpush1.msra.mxu0 %v810
        %907 = vmatprep.subr.mxu0 0.0
        %908 = vmatpush1.msra.mxu0 0.0
        %909 = vmatprep.subr.mxu0 0.0
        %910 = vmatpush1.msra.mxu0 0.0
        %911 = vmatprep.subr.mxu0 0.0
        %912 = vmatpush1.msra.mxu0 0.0
        %913 = vmatprep.subr.mxu0 0.0
        %914 = vmatpush1.msra.mxu0 0.0
        %915 = vmatprep.subr.mxu0 0.0
        %916 = vmatpush1.msra.mxu0 0.0
        %917 = vmatprep.subr.mxu0 0.0
        %918 = vmatpush1.msra.mxu0 0.0
        %919 = vmatprep.subr.mxu0 0.0
        %920 = vmatpush1.msra.mxu0 0.0
        %921 = vmatprep.subr.mxu0 0.0
        %922 = vmatpush1.msra.mxu0 0.0
        %923 = vmatprep.subr.mxu0 0.0
        %924 = vmatpush1.msra.mxu0 0.0
        %925 = vmatprep.subr.mxu0 0.0
        %926 = vmatpush1.msra.mxu0 0.0
        %927 = vmatprep.subr.mxu0 0.0
        %928 = vmatpush1.msra.mxu0 0.0
        %929 = vmatprep.subr.mxu0 0.0
        %930 = vmatpush1.msra.mxu0 0.0
        %931 = vmatprep.subr.mxu0 0.0
        %932 = vmatpush1.msra.mxu0 0.0
        %933 = vmatprep.subr.mxu0 0.0
        %934 = vmatpush1.msra.mxu0 0.0
        %935 = vmatprep.subr.mxu0 0.0
        %936 = vmatpush1.msra.mxu0 0.0
        %937 = vmatprep.subr.mxu0 0.0
        %938 = vmatpush1.msra.mxu0 0.0
        %939 = vmatprep.subr.mxu0 0.0
        %940 = vmatpush1.msra.mxu0 0.0
        %941 = vmatprep.subr.mxu0 0.0
        %942 = vmatpush1.msra.mxu0 0.0
        %943 = vmatprep.subr.mxu0 0.0
        %944 = vmatpush1.msra.mxu0 0.0
        %945 = vmatprep.subr.mxu0 0.0
        %946 = vmatpush1.msra.mxu0 0.0
        %947 = vmatprep.subr.mxu0 0.0
        %948 = vmatpush1.msra.mxu0 0.0
        %949 = vmatprep.subr.mxu0 0.0
        %950 = vmatpush1.msra.mxu0 0.0
        %951 = vmatprep.subr.mxu0 0.0
        %952 = vmatpush1.msra.mxu0 0.0
        %953 = vmatprep.subr.mxu0 0.0
        %954 = vmatpush1.msra.mxu0 0.0
        %955 = vmatprep.subr.mxu0 0.0
        %956 = vmatpush1.msra.mxu0 0.0
        %957 = vmatprep.subr.mxu0 0.0
        %958 = vmatpush1.msra.mxu0 0.0
        %959 = vmatprep.subr.mxu0 0.0
        %960 = vmatpush1.msra.mxu0 0.0
        %961 = vmatprep.subr.mxu0 0.0
        %962 = vmatpush1.msra.mxu0 0.0
        %963 = vmatprep.subr.mxu0 0.0
        %964 = vmatpush1.msra.mxu0 0.0
        %965 = vmatprep.subr.mxu0 0.0
        %966 = vmatpush1.msra.mxu0 0.0
        %967 = vmatprep.subr.mxu0 0.0
        %968 = vmatpush1.msra.mxu0 0.0
        %969 = vmatprep.mubr.f32.mxu0 0.0
        %970 = vmatmul.mubr.f32.gmra.mrb[0].mxu0 %v903
        %v971 = vpop.f32.mrb[0].mxu0
        %v972 = vadd.f32 0.0, %v971
        %v973 = vpop.f32.mrb[0].mxu0
        %974 = vdwg.mxu0
        %v975 = vld [vmem:[#allocation13] sm:$0xff]
        %976 = vrot.lane.b32.xlu0 %v624, 120
        %v977 = vpop.permute.xlu0 %976
        %978 = vrot.lane.b32.xlu0 %v717, 120
        %v979 = vpop.permute.xlu0 %978
        %v980 = vsel %vm813, %v977, 0
        %v982 = vsel %vm813, %v979, 0
        %984 = vmatprep.subr.mxu0 0.0
        %985 = vmatpush1.xpose.msra.mxu0 %v982
        %986 = vmatprep.subr.mxu0 0.0
        %987 = vmatpush1.xpose.msra.mxu0 0.0
        %988 = vmatprep.subr.mxu0 0.0
        %989 = vmatpush1.xpose.msra.mxu0 0.0
        %990 = vmatprep.subr.mxu0 0.0
        %991 = vmatpush1.xpose.msra.mxu0 0.0
        %992 = vmatprep.subr.mxu0 0.0
        %993 = vmatpush1.xpose.msra.mxu0 0.0
        %994 = vmatprep.subr.mxu0 0.0
        %995 = vmatpush1.xpose.msra.mxu0 0.0
        %996 = vmatprep.subr.mxu0 0.0
        %997 = vmatpush1.xpose.msra.mxu0 0.0
        %998 = vmatprep.subr.mxu0 0.0
        %999 = vmatpush1.xpose.msra.mxu0 0.0
        %1000 = vmatprep.subr.mxu0 0.0
        %1001 = vmatpush1.xpose.msra.mxu0 0.0
        %1002 = vmatprep.subr.mxu0 0.0
        %1003 = vmatpush1.xpose.msra.mxu0 0.0
        %1004 = vmatprep.subr.mxu0 0.0
        %1005 = vmatpush1.xpose.msra.mxu0 0.0
        %1006 = vmatprep.subr.mxu0 0.0
        %1007 = vmatpush1.xpose.msra.mxu0 0.0
        %1008 = vmatprep.subr.mxu0 0.0
        %1009 = vmatpush1.xpose.msra.mxu0 0.0
        %1010 = vmatprep.subr.mxu0 0.0
        %1011 = vmatpush1.xpose.msra.mxu0 0.0
        %1012 = vmatprep.subr.mxu0 0.0
        %1013 = vmatpush1.xpose.msra.mxu0 0.0
        %1014 = vmatprep.subr.mxu0 0.0
        %1015 = vmatpush1.xpose.msra.mxu0 0.0
        %1016 = vmatprep.subr.mxu0 0.0
        %1017 = vmatpush1.xpose.msra.mxu0 0.0
        %1018 = vmatprep.subr.mxu0 0.0
        %1019 = vmatpush1.xpose.msra.mxu0 0.0
        %1020 = vmatprep.subr.mxu0 0.0
        %1021 = vmatpush1.xpose.msra.mxu0 0.0
        %1022 = vmatprep.subr.mxu0 0.0
        %1023 = vmatpush1.xpose.msra.mxu0 0.0
        %1024 = vmatprep.subr.mxu0 0.0
        %1025 = vmatpush1.xpose.msra.mxu0 0.0
        %1026 = vmatprep.subr.mxu0 0.0
        %1027 = vmatpush1.xpose.msra.mxu0 0.0
        %1028 = vmatprep.subr.mxu0 0.0
        %1029 = vmatpush1.xpose.msra.mxu0 0.0
        %1030 = vmatprep.subr.mxu0 0.0
        %1031 = vmatpush1.xpose.msra.mxu0 0.0
        %1032 = vmatprep.subr.mxu0 0.0
        %1033 = vmatpush1.xpose.msra.mxu0 0.0
        %1034 = vmatprep.subr.mxu0 0.0
        %1035 = vmatpush1.xpose.msra.mxu0 0.0
        %1036 = vmatprep.subr.mxu0 0.0
        %1037 = vmatpush1.xpose.msra.mxu0 0.0
        %1038 = vmatprep.subr.mxu0 0.0
        %1039 = vmatpush1.xpose.msra.mxu0 0.0
        %1040 = vmatprep.subr.mxu0 0.0
        %1041 = vmatpush1.xpose.msra.mxu0 0.0
        %1042 = vmatprep.subr.mxu0 0.0
        %1043 = vmatpush1.xpose.msra.mxu0 0.0
        %1044 = vmatprep.subr.mxu0 0.0
        %1045 = vmatpush1.xpose.msra.mxu0 0.0
        %1046 = vmatprep.subr.mxu0 0.0
        %1047 = vmatpush1.xpose.msra.mxu0 0.0
        %1048 = vmatprep.mubr.f32.mxu0 0.0
        %1049 = vmatmul.mubr.f32.gmra.mrb[0].mxu0 %v980
        %v1050 = vpop.f32.mrb[0].mxu0
        %v1051 = vadd.f32 0.0, %v1050
        %v1052 = vpop.f32.mrb[0].mxu0
        %1053 = vdwg.mxu0
        %v1054 = vmul.f32 %v1051, 0.35355338
        %v1055 = vsel %vm813, %v1054, -inf
        %1056 = vmax.xlane.f32.xlu0 %v1055
        %v1057 = vpop.xlane.xlu0 %1056
        %v1058 = vsub.f32 %v1054, %v1057
        %v1059 = vmul.f32 %v1058, 1.442695
        %v1060 = vpow.pop %v1059
        %v1061 = vsel %vm813, %v1060, 0.0
        %1062 = vadd.xlane.f32.xlu0 %v1061
        %v1063 = vpop.xlane.xlu0 %1062
        %v1064 = vrcp.pop %v1063
        %v1065 = vmul.f32 %v1060, %v1064
        %1067 = vrot.lane.b32.xlu0 %v810, 120
        %v1068 = vpop.permute.xlu0 %1067
        %v1071 = vsel %vm813, %v1065, 0
        %1073 = vmatprep.subr.mxu0 0.0
        %1074 = vmatpush1.msra.mxu0 %v1068
        %1075 = vmatprep.subr.mxu0 0.0
        %1076 = vmatpush1.msra.mxu0 0.0
        %1077 = vmatprep.subr.mxu0 0.0
        %1078 = vmatpush1.msra.mxu0 0.0
        %1079 = vmatprep.subr.mxu0 0.0
        %1080 = vmatpush1.msra.mxu0 0.0
        %1081 = vmatprep.subr.mxu0 0.0
        %1082 = vmatpush1.msra.mxu0 0.0
        %1083 = vmatprep.subr.mxu0 0.0
        %1084 = vmatpush1.msra.mxu0 0.0
        %1085 = vmatprep.subr.mxu0 0.0
        %1086 = vmatpush1.msra.mxu0 0.0
        %1087 = vmatprep.subr.mxu0 0.0
        %1088 = vmatpush1.msra.mxu0 0.0
        %1089 = vmatprep.subr.mxu0 0.0
        %1090 = vmatpush1.msra.mxu0 0.0
        %1091 = vmatprep.subr.mxu0 0.0
        %1092 = vmatpush1.msra.mxu0 0.0
        %1093 = vmatprep.subr.mxu0 0.0
        %1094 = vmatpush1.msra.mxu0 0.0
        %1095 = vmatprep.subr.mxu0 0.0
        %1096 = vmatpush1.msra.mxu0 0.0
        %1097 = vmatprep.subr.mxu0 0.0
        %1098 = vmatpush1.msra.mxu0 0.0
        %1099 = vmatprep.subr.mxu0 0.0
        %1100 = vmatpush1.msra.mxu0 0.0
        %1101 = vmatprep.subr.mxu0 0.0
        %1102 = vmatpush1.msra.mxu0 0.0
        %1103 = vmatprep.subr.mxu0 0.0
        %1104 = vmatpush1.msra.mxu0 0.0
        %1105 = vmatprep.subr.mxu0 0.0
        %1106 = vmatpush1.msra.mxu0 0.0
        %1107 = vmatprep.subr.mxu0 0.0
        %1108 = vmatpush1.msra.mxu0 0.0
        %1109 = vmatprep.subr.mxu0 0.0
        %1110 = vmatpush1.msra.mxu0 0.0
        %1111 = vmatprep.subr.mxu0 0.0
        %1112 = vmatpush1.msra.mxu0 0.0
        %1113 = vmatprep.subr.mxu0 0.0
        %1114 = vmatpush1.msra.mxu0 0.0
        %1115 = vmatprep.subr.mxu0 0.0
        %1116 = vmatpush1.msra.mxu0 0.0
        %1117 = vmatprep.subr.mxu0 0.0
        %1118 = vmatpush1.msra.mxu0 0.0
        %1119 = vmatprep.subr.mxu0 0.0
        %1120 = vmatpush1.msra.mxu0 0.0
        %1121 = vmatprep.subr.mxu0 0.0
        %1122 = vmatpush1.msra.mxu0 0.0
        %1123 = vmatprep.subr.mxu0 0.0
        %1124 = vmatpush1.msra.mxu0 0.0
        %1125 = vmatprep.subr.mxu0 0.0
        %1126 = vmatpush1.msra.mxu0 0.0
        %1127 = vmatprep.subr.mxu0 0.0
        %1128 = vmatpush1.msra.mxu0 0.0
        %1129 = vmatprep.subr.mxu0 0.0
        %1130 = vmatpush1.msra.mxu0 0.0
        %1131 = vmatprep.subr.mxu0 0.0
        %1132 = vmatpush1.msra.mxu0 0.0
        %1133 = vmatprep.subr.mxu0 0.0
        %1134 = vmatpush1.msra.mxu0 0.0
        %1135 = vmatprep.subr.mxu0 0.0
        %1136 = vmatpush1.msra.mxu0 0.0
        %1137 = vmatprep.mubr.f32.mxu0 0.0
        %1138 = vmatmul.mubr.f32.gmra.mrb[0].mxu0 %v1071
        %v1139 = vpop.f32.mrb[0].mxu0
        %v1140 = vadd.f32 0.0, %v1139
        %v1141 = vpop.f32.mrb[0].mxu0
        %1142 = vdwg.mxu0
        %v1143 = vld [vmem:[#allocation13 + $0x8] sm:$0xff]
        %v1145 = vsel %vm813, %v1140, 0
        %1147 = vmatprep.subr.mxu0 0.0
        %1148 = vmatpush1.msra.mxu0 %v1143
        %1149 = vmatprep.subr.mxu0 0.0
        %1150 = vmatpush1.msra.mxu0 0.0
        %1151 = vmatprep.subr.mxu0 0.0
        %1152 = vmatpush1.msra.mxu0 0.0
        %1153 = vmatprep.subr.mxu0 0.0
        %1154 = vmatpush1.msra.mxu0 0.0
        %1155 = vmatprep.subr.mxu0 0.0
        %1156 = vmatpush1.msra.mxu0 0.0
        %1157 = vmatprep.subr.mxu0 0.0
        %1158 = vmatpush1.msra.mxu0 0.0
        %1159 = vmatprep.subr.mxu0 0.0
        %1160 = vmatpush1.msra.mxu0 0.0
        %1161 = vmatprep.subr.mxu0 0.0
        %1162 = vmatpush1.msra.mxu0 0.0
        %1163 = vmatprep.subr.mxu0 0.0
        %1164 = vmatpush1.msra.mxu0 0.0
        %1165 = vmatprep.subr.mxu0 0.0
        %1166 = vmatpush1.msra.mxu0 0.0
        %1167 = vmatprep.subr.mxu0 0.0
        %1168 = vmatpush1.msra.mxu0 0.0
        %1169 = vmatprep.subr.mxu0 0.0
        %1170 = vmatpush1.msra.mxu0 0.0
        %1171 = vmatprep.subr.mxu0 0.0
        %1172 = vmatpush1.msra.mxu0 0.0
        %1173 = vmatprep.subr.mxu0 0.0
        %1174 = vmatpush1.msra.mxu0 0.0
        %1175 = vmatprep.subr.mxu0 0.0
        %1176 = vmatpush1.msra.mxu0 0.0
        %1177 = vmatprep.subr.mxu0 0.0
        %1178 = vmatpush1.msra.mxu0 0.0
        %1179 = vmatprep.subr.mxu0 0.0
        %1180 = vmatpush1.msra.mxu0 0.0
        %1181 = vmatprep.subr.mxu0 0.0
        %1182 = vmatpush1.msra.mxu0 0.0
        %1183 = vmatprep.subr.mxu0 0.0
        %1184 = vmatpush1.msra.mxu0 0.0
        %1185 = vmatprep.subr.mxu0 0.0
        %1186 = vmatpush1.msra.mxu0 0.0
        %1187 = vmatprep.subr.mxu0 0.0
        %1188 = vmatpush1.msra.mxu0 0.0
        %1189 = vmatprep.subr.mxu0 0.0
        %1190 = vmatpush1.msra.mxu0 0.0
        %1191 = vmatprep.subr.mxu0 0.0
        %1192 = vmatpush1.msra.mxu0 0.0
        %1193 = vmatprep.subr.mxu0 0.0
        %1194 = vmatpush1.msra.mxu0 0.0
        %1195 = vmatprep.subr.mxu0 0.0
        %1196 = vmatpush1.msra.mxu0 0.0
        %1197 = vmatprep.subr.mxu0 0.0
        %1198 = vmatpush1.msra.mxu0 0.0
        %1199 = vmatprep.subr.mxu0 0.0
        %1200 = vmatpush1.msra.mxu0 0.0
        %1201 = vmatprep.subr.mxu0 0.0
        %1202 = vmatpush1.msra.mxu0 0.0
        %1203 = vmatprep.subr.mxu0 0.0
        %1204 = vmatpush1.msra.mxu0 0.0
        %1205 = vmatprep.subr.mxu0 0.0
        %1206 = vmatpush1.msra.mxu0 0.0
        %1207 = vmatprep.subr.mxu0 0.0
        %1208 = vmatpush1.msra.mxu0 0.0
        %1209 = vmatprep.subr.mxu0 0.0
        %1210 = vmatpush1.msra.mxu0 0.0
        %1211 = vmatprep.mubr.f32.mxu0 0.0
        %1212 = vmatmul.mubr.f32.gmra.mrb[0].mxu0 %v1145
        %v1213 = vpop.f32.mrb[0].mxu0
        %v1214 = vadd.f32 0.0, %v1213
        %v1215 = vpop.f32.mrb[0].mxu0
        %1216 = vdwg.mxu0
        %v1218 = vsel %vm813, %v972, 0
        %1220 = vmatprep.subr.mxu0 0.0
        %1221 = vmatpush1.msra.mxu0 %v975
        %1222 = vmatprep.subr.mxu0 0.0
        %1223 = vmatpush1.msra.mxu0 0.0
        %1224 = vmatprep.subr.mxu0 0.0
        %1225 = vmatpush1.msra.mxu0 0.0
        %1226 = vmatprep.subr.mxu0 0.0
        %1227 = vmatpush1.msra.mxu0 0.0
        %1228 = vmatprep.subr.mxu0 0.0
        %1229 = vmatpush1.msra.mxu0 0.0
        %1230 = vmatprep.subr.mxu0 0.0
        %1231 = vmatpush1.msra.mxu0 0.0
        %1232 = vmatprep.subr.mxu0 0.0
        %1233 = vmatpush1.msra.mxu0 0.0
        %1234 = vmatprep.subr.mxu0 0.0
        %1235 = vmatpush1.msra.mxu0 0.0
        %1236 = vmatprep.subr.mxu0 0.0
        %1237 = vmatpush1.msra.mxu0 0.0
        %1238 = vmatprep.subr.mxu0 0.0
        %1239 = vmatpush1.msra.mxu0 0.0
        %1240 = vmatprep.subr.mxu0 0.0
        %1241 = vmatpush1.msra.mxu0 0.0
        %1242 = vmatprep.subr.mxu0 0.0
        %1243 = vmatpush1.msra.mxu0 0.0
        %1244 = vmatprep.subr.mxu0 0.0
        %1245 = vmatpush1.msra.mxu0 0.0
        %1246 = vmatprep.subr.mxu0 0.0
        %1247 = vmatpush1.msra.mxu0 0.0
        %1248 = vmatprep.subr.mxu0 0.0
        %1249 = vmatpush1.msra.mxu0 0.0
        %1250 = vmatprep.subr.mxu0 0.0
        %1251 = vmatpush1.msra.mxu0 0.0
        %1252 = vmatprep.subr.mxu0 0.0
        %1253 = vmatpush1.msra.mxu0 0.0
        %1254 = vmatprep.subr.mxu0 0.0
        %1255 = vmatpush1.msra.mxu0 0.0
        %1256 = vmatprep.subr.mxu0 0.0
        %1257 = vmatpush1.msra.mxu0 0.0
        %1258 = vmatprep.subr.mxu0 0.0
        %1259 = vmatpush1.msra.mxu0 0.0
        %1260 = vmatprep.subr.mxu0 0.0
        %1261 = vmatpush1.msra.mxu0 0.0
        %1262 = vmatprep.subr.mxu0 0.0
        %1263 = vmatpush1.msra.mxu0 0.0
        %1264 = vmatprep.subr.mxu0 0.0
        %1265 = vmatpush1.msra.mxu0 0.0
        %1266 = vmatprep.subr.mxu0 0.0
        %1267 = vmatpush1.msra.mxu0 0.0
        %1268 = vmatprep.subr.mxu0 0.0
        %1269 = vmatpush1.msra.mxu0 0.0
        %1270 = vmatprep.subr.mxu0 0.0
        %1271 = vmatpush1.msra.mxu0 0.0
        %1272 = vmatprep.subr.mxu0 0.0
        %1273 = vmatpush1.msra.mxu0 0.0
        %1274 = vmatprep.subr.mxu0 0.0
        %1275 = vmatpush1.msra.mxu0 0.0
        %1276 = vmatprep.subr.mxu0 0.0
        %1277 = vmatpush1.msra.mxu0 0.0
        %1278 = vmatprep.subr.mxu0 0.0
        %1279 = vmatpush1.msra.mxu0 0.0
        %1280 = vmatprep.subr.mxu0 0.0
        %1281 = vmatpush1.msra.mxu0 0.0
        %1282 = vmatprep.subr.mxu0 0.0
        %1283 = vmatpush1.msra.mxu0 0.0
        %1284 = vmatprep.mubr.f32.mxu0 0.0
        %1285 = vmatmul.mubr.f32.gmra.mrb[0].mxu0 %v1218
        %v1286 = vpop.f32.mrb[0].mxu0
        %v1287 = vadd.f32 %v1214, %v1286
        %v1288 = vpop.f32.mrb[0].mxu0
        %1289 = vdwg.mxu0
        %1290 = vrot.lane.b32.xlu0 %v624, 112
        %v1291 = vpop.permute.xlu0 %1290
        %1292 = vrot.lane.b32.xlu0 %v717, 112
        %v1293 = vpop.permute.xlu0 %1292
        %v1294 = vsel %vm813, %v1291, 0
        %v1296 = vsel %vm813, %v1293, 0
        %1298 = vmatprep.subr.mxu0 0.0
        %1299 = vmatpush1.xpose.msra.mxu0 %v1296
        %1300 = vmatprep.subr.mxu0 0.0
        %1301 = vmatpush1.xpose.msra.mxu0 0.0
        %1302 = vmatprep.subr.mxu0 0.0
        %1303 = vmatpush1.xpose.msra.mxu0 0.0
        %1304 = vmatprep.subr.mxu0 0.0
        %1305 = vmatpush1.xpose.msra.mxu0 0.0
        %1306 = vmatprep.subr.mxu0 0.0
        %1307 = vmatpush1.xpose.msra.mxu0 0.0
        %1308 = vmatprep.subr.mxu0 0.0
        %1309 = vmatpush1.xpose.msra.mxu0 0.0
        %1310 = vmatprep.subr.mxu0 0.0
        %1311 = vmatpush1.xpose.msra.mxu0 0.0
        %1312 = vmatprep.subr.mxu0 0.0
        %1313 = vmatpush1.xpose.msra.mxu0 0.0
        %1314 = vmatprep.subr.mxu0 0.0
        %1315 = vmatpush1.xpose.msra.mxu0 0.0
        %1316 = vmatprep.subr.mxu0 0.0
        %1317 = vmatpush1.xpose.msra.mxu0 0.0
        %1318 = vmatprep.subr.mxu0 0.0
        %1319 = vmatpush1.xpose.msra.mxu0 0.0
        %1320 = vmatprep.subr.mxu0 0.0
        %1321 = vmatpush1.xpose.msra.mxu0 0.0
        %1322 = vmatprep.subr.mxu0 0.0
        %1323 = vmatpush1.xpose.msra.mxu0 0.0
        %1324 = vmatprep.subr.mxu0 0.0
        %1325 = vmatpush1.xpose.msra.mxu0 0.0
        %1326 = vmatprep.subr.mxu0 0.0
        %1327 = vmatpush1.xpose.msra.mxu0 0.0
        %1328 = vmatprep.subr.mxu0 0.0
        %1329 = vmatpush1.xpose.msra.mxu0 0.0
        %1330 = vmatprep.subr.mxu0 0.0
        %1331 = vmatpush1.xpose.msra.mxu0 0.0
        %1332 = vmatprep.subr.mxu0 0.0
        %1333 = vmatpush1.xpose.msra.mxu0 0.0
        %1334 = vmatprep.subr.mxu0 0.0
        %1335 = vmatpush1.xpose.msra.mxu0 0.0
        %1336 = vmatprep.subr.mxu0 0.0
        %1337 = vmatpush1.xpose.msra.mxu0 0.0
        %1338 = vmatprep.subr.mxu0 0.0
        %1339 = vmatpush1.xpose.msra.mxu0 0.0
        %1340 = vmatprep.subr.mxu0 0.0
        %1341 = vmatpush1.xpose.msra.mxu0 0.0
        %1342 = vmatprep.subr.mxu0 0.0
        %1343 = vmatpush1.xpose.msra.mxu0 0.0
        %1344 = vmatprep.subr.mxu0 0.0
        %1345 = vmatpush1.xpose.msra.mxu0 0.0
        %1346 = vmatprep.subr.mxu0 0.0
        %1347 = vmatpush1.xpose.msra.mxu0 0.0
        %1348 = vmatprep.subr.mxu0 0.0
        %1349 = vmatpush1.xpose.msra.mxu0 0.0
        %1350 = vmatprep.subr.mxu0 0.0
        %1351 = vmatpush1.xpose.msra.mxu0 0.0
        %1352 = vmatprep.subr.mxu0 0.0
        %1353 = vmatpush1.xpose.msra.mxu0 0.0
        %1354 = vmatprep.subr.mxu0 0.0
        %1355 = vmatpush1.xpose.msra.mxu0 0.0
        %1356 = vmatprep.subr.mxu0 0.0
        %1357 = vmatpush1.xpose.msra.mxu0 0.0
        %1358 = vmatprep.subr.mxu0 0.0
        %1359 = vmatpush1.xpose.msra.mxu0 0.0
        %1360 = vmatprep.subr.mxu0 0.0
        %1361 = vmatpush1.xpose.msra.mxu0 0.0
        %1362 = vmatprep.mubr.f32.mxu0 0.0
        %1363 = vmatmul.mubr.f32.gmra.mrb[0].mxu0 %v1294
        %v1364 = vpop.f32.mrb[0].mxu0
        %v1365 = vadd.f32 0.0, %v1364
        %v1366 = vpop.f32.mrb[0].mxu0
        %1367 = vdwg.mxu0
        %v1368 = vmul.f32 %v1365, 0.35355338
        %v1369 = vsel %vm813, %v1368, -inf
        %1370 = vmax.xlane.f32.xlu0 %v1369
        %v1371 = vpop.xlane.xlu0 %1370
        %v1372 = vsub.f32 %v1368, %v1371
        %v1373 = vmul.f32 %v1372, 1.442695
        %v1374 = vpow.pop %v1373
        %v1375 = vsel %vm813, %v1374, 0.0
        %1376 = vadd.xlane.f32.xlu0 %v1375
        %v1377 = vpop.xlane.xlu0 %1376
        %v1378 = vrcp.pop %v1377
        %v1379 = vmul.f32 %v1374, %v1378
        %1380 = vrot.lane.b32.xlu0 %v810, 112
        %v1381 = vpop.permute.xlu0 %1380
        %v1384 = vsel %vm813, %v1379, 0
        %1386 = vmatprep.subr.mxu0 0.0
        %1387 = vmatpush1.msra.mxu0 %v1381
        %1388 = vmatprep.subr.mxu0 0.0
        %1389 = vmatpush1.msra.mxu0 0.0
        %1390 = vmatprep.subr.mxu0 0.0
        %1391 = vmatpush1.msra.mxu0 0.0
        %1392 = vmatprep.subr.mxu0 0.0
        %1393 = vmatpush1.msra.mxu0 0.0
        %1394 = vmatprep.subr.mxu0 0.0
        %1395 = vmatpush1.msra.mxu0 0.0
        %1396 = vmatprep.subr.mxu0 0.0
        %1397 = vmatpush1.msra.mxu0 0.0
        %1398 = vmatprep.subr.mxu0 0.0
        %1399 = vmatpush1.msra.mxu0 0.0
        %1400 = vmatprep.subr.mxu0 0.0
        %1401 = vmatpush1.msra.mxu0 0.0
        %1402 = vmatprep.subr.mxu0 0.0
        %1403 = vmatpush1.msra.mxu0 0.0
        %1404 = vmatprep.subr.mxu0 0.0
        %1405 = vmatpush1.msra.mxu0 0.0
        %1406 = vmatprep.subr.mxu0 0.0
        %1407 = vmatpush1.msra.mxu0 0.0
        %1408 = vmatprep.subr.mxu0 0.0
        %1409 = vmatpush1.msra.mxu0 0.0
        %1410 = vmatprep.subr.mxu0 0.0
        %1411 = vmatpush1.msra.mxu0 0.0
        %1412 = vmatprep.subr.mxu0 0.0
        %1413 = vmatpush1.msra.mxu0 0.0
        %1414 = vmatprep.subr.mxu0 0.0
        %1415 = vmatpush1.msra.mxu0 0.0
        %1416 = vmatprep.subr.mxu0 0.0
        %1417 = vmatpush1.msra.mxu0 0.0
        %1418 = vmatprep.subr.mxu0 0.0
        %1419 = vmatpush1.msra.mxu0 0.0
        %1420 = vmatprep.subr.mxu0 0.0
        %1421 = vmatpush1.msra.mxu0 0.0
        %1422 = vmatprep.subr.mxu0 0.0
        %1423 = vmatpush1.msra.mxu0 0.0
        %1424 = vmatprep.subr.mxu0 0.0
        %1425 = vmatpush1.msra.mxu0 0.0
        %1426 = vmatprep.subr.mxu0 0.0
        %1427 = vmatpush1.msra.mxu0 0.0
        %1428 = vmatprep.subr.mxu0 0.0
        %1429 = vmatpush1.msra.mxu0 0.0
        %1430 = vmatprep.subr.mxu0 0.0
        %1431 = vmatpush1.msra.mxu0 0.0
        %1432 = vmatprep.subr.mxu0 0.0
        %1433 = vmatpush1.msra.mxu0 0.0
        %1434 = vmatprep.subr.mxu0 0.0
        %1435 = vmatpush1.msra.mxu0 0.0
        %1436 = vmatprep.subr.mxu0 0.0
        %1437 = vmatpush1.msra.mxu0 0.0
        %1438 = vmatprep.subr.mxu0 0.0
        %1439 = vmatpush1.msra.mxu0 0.0
        %1440 = vmatprep.subr.mxu0 0.0
        %1441 = vmatpush1.msra.mxu0 0.0
        %1442 = vmatprep.subr.mxu0 0.0
        %1443 = vmatpush1.msra.mxu0 0.0
        %1444 = vmatprep.subr.mxu0 0.0
        %1445 = vmatpush1.msra.mxu0 0.0
        %1446 = vmatprep.subr.mxu0 0.0
        %1447 = vmatpush1.msra.mxu0 0.0
        %1448 = vmatprep.subr.mxu0 0.0
        %1449 = vmatpush1.msra.mxu0 0.0
        %1450 = vmatprep.mubr.f32.mxu0 0.0
        %1451 = vmatmul.mubr.f32.gmra.mrb[0].mxu0 %v1384
        %v1452 = vpop.f32.mrb[0].mxu0
        %v1453 = vadd.f32 0.0, %v1452
        %v1454 = vpop.f32.mrb[0].mxu0
        %1455 = vdwg.mxu0
        %v1456 = vld [vmem:[#allocation13 + $0x10] sm:$0xff]
        %v1458 = vsel %vm813, %v1453, 0
        %1460 = vmatprep.subr.mxu0 0.0
        %1461 = vmatpush1.msra.mxu0 %v1456
        %1462 = vmatprep.subr.mxu0 0.0
        %1463 = vmatpush1.msra.mxu0 0.0
        %1464 = vmatprep.subr.mxu0 0.0
        %1465 = vmatpush1.msra.mxu0 0.0
        %1466 = vmatprep.subr.mxu0 0.0
        %1467 = vmatpush1.msra.mxu0 0.0
        %1468 = vmatprep.subr.mxu0 0.0
        %1469 = vmatpush1.msra.mxu0 0.0
        %1470 = vmatprep.subr.mxu0 0.0
        %1471 = vmatpush1.msra.mxu0 0.0
        %1472 = vmatprep.subr.mxu0 0.0
        %1473 = vmatpush1.msra.mxu0 0.0
        %1474 = vmatprep.subr.mxu0 0.0
        %1475 = vmatpush1.msra.mxu0 0.0
        %1476 = vmatprep.subr.mxu0 0.0
        %1477 = vmatpush1.msra.mxu0 0.0
        %1478 = vmatprep.subr.mxu0 0.0
        %1479 = vmatpush1.msra.mxu0 0.0
        %1480 = vmatprep.subr.mxu0 0.0
        %1481 = vmatpush1.msra.mxu0 0.0
        %1482 = vmatprep.subr.mxu0 0.0
        %1483 = vmatpush1.msra.mxu0 0.0
        %1484 = vmatprep.subr.mxu0 0.0
        %1485 = vmatpush1.msra.mxu0 0.0
        %1486 = vmatprep.subr.mxu0 0.0
        %1487 = vmatpush1.msra.mxu0 0.0
        %1488 = vmatprep.subr.mxu0 0.0
        %1489 = vmatpush1.msra.mxu0 0.0
        %1490 = vmatprep.subr.mxu0 0.0
        %1491 = vmatpush1.msra.mxu0 0.0
        %1492 = vmatprep.subr.mxu0 0.0
        %1493 = vmatpush1.msra.mxu0 0.0
        %1494 = vmatprep.subr.mxu0 0.0
        %1495 = vmatpush1.msra.mxu0 0.0
        %1496 = vmatprep.subr.mxu0 0.0
        %1497 = vmatpush1.msra.mxu0 0.0
        %1498 = vmatprep.subr.mxu0 0.0
        %1499 = vmatpush1.msra.mxu0 0.0
        %1500 = vmatprep.subr.mxu0 0.0
        %1501 = vmatpush1.msra.mxu0 0.0
        %1502 = vmatprep.subr.mxu0 0.0
        %1503 = vmatpush1.msra.mxu0 0.0
        %1504 = vmatprep.subr.mxu0 0.0
        %1505 = vmatpush1.msra.mxu0 0.0
        %1506 = vmatprep.subr.mxu0 0.0
        %1507 = vmatpush1.msra.mxu0 0.0
        %1508 = vmatprep.subr.mxu0 0.0
        %1509 = vmatpush1.msra.mxu0 0.0
        %1510 = vmatprep.subr.mxu0 0.0
        %1511 = vmatpush1.msra.mxu0 0.0
        %1512 = vmatprep.subr.mxu0 0.0
        %1513 = vmatpush1.msra.mxu0 0.0
        %1514 = vmatprep.subr.mxu0 0.0
        %1515 = vmatpush1.msra.mxu0 0.0
        %1516 = vmatprep.subr.mxu0 0.0
        %1517 = vmatpush1.msra.mxu0 0.0
        %1518 = vmatprep.subr.mxu0 0.0
        %1519 = vmatpush1.msra.mxu0 0.0
        %1520 = vmatprep.subr.mxu0 0.0
        %1521 = vmatpush1.msra.mxu0 0.0
        %1522 = vmatprep.subr.mxu0 0.0
        %1523 = vmatpush1.msra.mxu0 0.0
        %1524 = vmatprep.mubr.f32.mxu0 0.0
        %1525 = vmatmul.mubr.f32.gmra.mrb[0].mxu0 %v1458
        %v1526 = vpop.f32.mrb[0].mxu0
        %v1527 = vadd.f32 0.0, %v1526
        %v1528 = vpop.f32.mrb[0].mxu0
        %1529 = vdwg.mxu0
        %v1530 = vadd.f32 %v1287, %v1527
        %1531 = vrot.lane.b32.xlu0 %v624, 104
        %v1532 = vpop.permute.xlu0 %1531
        %1533 = vrot.lane.b32.xlu0 %v717, 104
        %v1534 = vpop.permute.xlu0 %1533
        %v1535 = vsel %vm813, %v1532, 0
        %v1537 = vsel %vm813, %v1534, 0
        %1539 = vmatprep.subr.mxu0 0.0
        %1540 = vmatpush1.xpose.msra.mxu0 %v1537
        %1541 = vmatprep.subr.mxu0 0.0
        %1542 = vmatpush1.xpose.msra.mxu0 0.0
        %1543 = vmatprep.subr.mxu0 0.0
        %1544 = vmatpush1.xpose.msra.mxu0 0.0
        %1545 = vmatprep.subr.mxu0 0.0
        %1546 = vmatpush1.xpose.msra.mxu0 0.0
        %1547 = vmatprep.subr.mxu0 0.0
        %1548 = vmatpush1.xpose.msra.mxu0 0.0
        %1549 = vmatprep.subr.mxu0 0.0
        %1550 = vmatpush1.xpose.msra.mxu0 0.0
        %1551 = vmatprep.subr.mxu0 0.0
        %1552 = vmatpush1.xpose.msra.mxu0 0.0
        %1553 = vmatprep.subr.mxu0 0.0
        %1554 = vmatpush1.xpose.msra.mxu0 0.0
        %1555 = vmatprep.subr.mxu0 0.0
        %1556 = vmatpush1.xpose.msra.mxu0 0.0
        %1557 = vmatprep.subr.mxu0 0.0
        %1558 = vmatpush1.xpose.msra.mxu0 0.0
        %1559 = vmatprep.subr.mxu0 0.0
        %1560 = vmatpush1.xpose.msra.mxu0 0.0
        %1561 = vmatprep.subr.mxu0 0.0
        %1562 = vmatpush1.xpose.msra.mxu0 0.0
        %1563 = vmatprep.subr.mxu0 0.0
        %1564 = vmatpush1.xpose.msra.mxu0 0.0
        %1565 = vmatprep.subr.mxu0 0.0
        %1566 = vmatpush1.xpose.msra.mxu0 0.0
        %1567 = vmatprep.subr.mxu0 0.0
        %1568 = vmatpush1.xpose.msra.mxu0 0.0
        %1569 = vmatprep.subr.mxu0 0.0
        %1570 = vmatpush1.xpose.msra.mxu0 0.0
        %1571 = vmatprep.subr.mxu0 0.0
        %1572 = vmatpush1.xpose.msra.mxu0 0.0
        %1573 = vmatprep.subr.mxu0 0.0
        %1574 = vmatpush1.xpose.msra.mxu0 0.0
        %1575 = vmatprep.subr.mxu0 0.0
        %1576 = vmatpush1.xpose.msra.mxu0 0.0
        %1577 = vmatprep.subr.mxu0 0.0
        %1578 = vmatpush1.xpose.msra.mxu0 0.0
        %1579 = vmatprep.subr.mxu0 0.0
        %1580 = vmatpush1.xpose.msra.mxu0 0.0
        %1581 = vmatprep.subr.mxu0 0.0
        %1582 = vmatpush1.xpose.msra.mxu0 0.0
        %1583 = vmatprep.subr.mxu0 0.0
        %1584 = vmatpush1.xpose.msra.mxu0 0.0
        %1585 = vmatprep.subr.mxu0 0.0
        %1586 = vmatpush1.xpose.msra.mxu0 0.0
        %1587 = vmatprep.subr.mxu0 0.0
        %1588 = vmatpush1.xpose.msra.mxu0 0.0
        %1589 = vmatprep.subr.mxu0 0.0
        %1590 = vmatpush1.xpose.msra.mxu0 0.0
        %1591 = vmatprep.subr.mxu0 0.0
        %1592 = vmatpush1.xpose.msra.mxu0 0.0
        %1593 = vmatprep.subr.mxu0 0.0
        %1594 = vmatpush1.xpose.msra.mxu0 0.0
        %1595 = vmatprep.subr.mxu0 0.0
        %1596 = vmatpush1.xpose.msra.mxu0 0.0
        %1597 = vmatprep.subr.mxu0 0.0
        %1598 = vmatpush1.xpose.msra.mxu0 0.0
        %1599 = vmatprep.subr.mxu0 0.0
        %1600 = vmatpush1.xpose.msra.mxu0 0.0
        %1601 = vmatprep.subr.mxu0 0.0
        %1602 = vmatpush1.xpose.msra.mxu0 0.0
        %1603 = vmatprep.mubr.f32.mxu0 0.0
        %1604 = vmatmul.mubr.f32.gmra.mrb[0].mxu0 %v1535
        %v1605 = vpop.f32.mrb[0].mxu0
        %v1606 = vadd.f32 0.0, %v1605
        %v1607 = vpop.f32.mrb[0].mxu0
        %1608 = vdwg.mxu0
        %v1609 = vmul.f32 %v1606, 0.35355338
        %v1610 = vsel %vm813, %v1609, -inf
        %1611 = vmax.xlane.f32.xlu0 %v1610
        %v1612 = vpop.xlane.xlu0 %1611
        %v1613 = vsub.f32 %v1609, %v1612
        %v1614 = vmul.f32 %v1613, 1.442695
        %v1615 = vpow.pop %v1614
        %v1616 = vsel %vm813, %v1615, 0.0
        %1617 = vadd.xlane.f32.xlu0 %v1616
        %v1618 = vpop.xlane.xlu0 %1617
        %v1619 = vrcp.pop %v1618
        %v1620 = vmul.f32 %v1615, %v1619
        %1621 = vrot.lane.b32.xlu0 %v810, 104
        %v1622 = vpop.permute.xlu0 %1621
        %v1625 = vsel %vm813, %v1620, 0
        %1627 = vmatprep.subr.mxu0 0.0
        %1628 = vmatpush1.msra.mxu0 %v1622
        %1629 = vmatprep.subr.mxu0 0.0
        %1630 = vmatpush1.msra.mxu0 0.0
        %1631 = vmatprep.subr.mxu0 0.0
        %1632 = vmatpush1.msra.mxu0 0.0
        %1633 = vmatprep.subr.mxu0 0.0
        %1634 = vmatpush1.msra.mxu0 0.0
        %1635 = vmatprep.subr.mxu0 0.0
        %1636 = vmatpush1.msra.mxu0 0.0
        %1637 = vmatprep.subr.mxu0 0.0
        %1638 = vmatpush1.msra.mxu0 0.0
        %1639 = vmatprep.subr.mxu0 0.0
        %1640 = vmatpush1.msra.mxu0 0.0
        %1641 = vmatprep.subr.mxu0 0.0
        %1642 = vmatpush1.msra.mxu0 0.0
        %1643 = vmatprep.subr.mxu0 0.0
        %1644 = vmatpush1.msra.mxu0 0.0
        %1645 = vmatprep.subr.mxu0 0.0
        %1646 = vmatpush1.msra.mxu0 0.0
        %1647 = vmatprep.subr.mxu0 0.0
        %1648 = vmatpush1.msra.mxu0 0.0
        %1649 = vmatprep.subr.mxu0 0.0
        %1650 = vmatpush1.msra.mxu0 0.0
        %1651 = vmatprep.subr.mxu0 0.0
        %1652 = vmatpush1.msra.mxu0 0.0
        %1653 = vmatprep.subr.mxu0 0.0
        %1654 = vmatpush1.msra.mxu0 0.0
        %1655 = vmatprep.subr.mxu0 0.0
        %1656 = vmatpush1.msra.mxu0 0.0
        %1657 = vmatprep.subr.mxu0 0.0
        %1658 = vmatpush1.msra.mxu0 0.0
        %1659 = vmatprep.subr.mxu0 0.0
        %1660 = vmatpush1.msra.mxu0 0.0
        %1661 = vmatprep.subr.mxu0 0.0
        %1662 = vmatpush1.msra.mxu0 0.0
        %1663 = vmatprep.subr.mxu0 0.0
        %1664 = vmatpush1.msra.mxu0 0.0
        %1665 = vmatprep.subr.mxu0 0.0
        %1666 = vmatpush1.msra.mxu0 0.0
        %1667 = vmatprep.subr.mxu0 0.0
        %1668 = vmatpush1.msra.mxu0 0.0
        %1669 = vmatprep.subr.mxu0 0.0
        %1670 = vmatpush1.msra.mxu0 0.0
        %1671 = vmatprep.subr.mxu0 0.0
        %1672 = vmatpush1.msra.mxu0 0.0
        %1673 = vmatprep.subr.mxu0 0.0
        %1674 = vmatpush1.msra.mxu0 0.0
        %1675 = vmatprep.subr.mxu0 0.0
        %1676 = vmatpush1.msra.mxu0 0.0
        %1677 = vmatprep.subr.mxu0 0.0
        %1678 = vmatpush1.msra.mxu0 0.0
        %1679 = vmatprep.subr.mxu0 0.0
        %1680 = vmatpush1.msra.mxu0 0.0
        %1681 = vmatprep.subr.mxu0 0.0
        %1682 = vmatpush1.msra.mxu0 0.0
        %1683 = vmatprep.subr.mxu0 0.0
        %1684 = vmatpush1.msra.mxu0 0.0
        %1685 = vmatprep.subr.mxu0 0.0
        %1686 = vmatpush1.msra.mxu0 0.0
        %1687 = vmatprep.subr.mxu0 0.0
        %1688 = vmatpush1.msra.mxu0 0.0
        %1689 = vmatprep.subr.mxu0 0.0
        %1690 = vmatpush1.msra.mxu0 0.0
        %1691 = vmatprep.mubr.f32.mxu0 0.0
        %1692 = vmatmul.mubr.f32.gmra.mrb[0].mxu0 %v1625
        %v1693 = vpop.f32.mrb[0].mxu0
        %v1694 = vadd.f32 0.0, %v1693
        %v1695 = vpop.f32.mrb[0].mxu0
        %1696 = vdwg.mxu0
        %v1697 = vld [vmem:[#allocation13 + $0x18] sm:$0xff]
        %v1699 = vsel %vm813, %v1694, 0
        %1701 = vmatprep.subr.mxu0 0.0
        %1702 = vmatpush1.msra.mxu0 %v1697
        %1703 = vmatprep.subr.mxu0 0.0
        %1704 = vmatpush1.msra.mxu0 0.0
        %1705 = vmatprep.subr.mxu0 0.0
        %1706 = vmatpush1.msra.mxu0 0.0
        %1707 = vmatprep.subr.mxu0 0.0
        %1708 = vmatpush1.msra.mxu0 0.0
        %1709 = vmatprep.subr.mxu0 0.0
        %1710 = vmatpush1.msra.mxu0 0.0
        %1711 = vmatprep.subr.mxu0 0.0
        %1712 = vmatpush1.msra.mxu0 0.0
        %1713 = vmatprep.subr.mxu0 0.0
        %1714 = vmatpush1.msra.mxu0 0.0
        %1715 = vmatprep.subr.mxu0 0.0
        %1716 = vmatpush1.msra.mxu0 0.0
        %1717 = vmatprep.subr.mxu0 0.0
        %1718 = vmatpush1.msra.mxu0 0.0
        %1719 = vmatprep.subr.mxu0 0.0
        %1720 = vmatpush1.msra.mxu0 0.0
        %1721 = vmatprep.subr.mxu0 0.0
        %1722 = vmatpush1.msra.mxu0 0.0
        %1723 = vmatprep.subr.mxu0 0.0
        %1724 = vmatpush1.msra.mxu0 0.0
        %1725 = vmatprep.subr.mxu0 0.0
        %1726 = vmatpush1.msra.mxu0 0.0
        %1727 = vmatprep.subr.mxu0 0.0
        %1728 = vmatpush1.msra.mxu0 0.0
        %1729 = vmatprep.subr.mxu0 0.0
        %1730 = vmatpush1.msra.mxu0 0.0
        %1731 = vmatprep.subr.mxu0 0.0
        %1732 = vmatpush1.msra.mxu0 0.0
        %1733 = vmatprep.subr.mxu0 0.0
        %1734 = vmatpush1.msra.mxu0 0.0
        %1735 = vmatprep.subr.mxu0 0.0
        %1736 = vmatpush1.msra.mxu0 0.0
        %1737 = vmatprep.subr.mxu0 0.0
        %1738 = vmatpush1.msra.mxu0 0.0
        %1739 = vmatprep.subr.mxu0 0.0
        %1740 = vmatpush1.msra.mxu0 0.0
        %1741 = vmatprep.subr.mxu0 0.0
        %1742 = vmatpush1.msra.mxu0 0.0
        %1743 = vmatprep.subr.mxu0 0.0
        %1744 = vmatpush1.msra.mxu0 0.0
        %1745 = vmatprep.subr.mxu0 0.0
        %1746 = vmatpush1.msra.mxu0 0.0
        %1747 = vmatprep.subr.mxu0 0.0
        %1748 = vmatpush1.msra.mxu0 0.0
        %1749 = vmatprep.subr.mxu0 0.0
        %1750 = vmatpush1.msra.mxu0 0.0
        %1751 = vmatprep.subr.mxu0 0.0
        %1752 = vmatpush1.msra.mxu0 0.0
        %1753 = vmatprep.subr.mxu0 0.0
        %1754 = vmatpush1.msra.mxu0 0.0
        %1755 = vmatprep.subr.mxu0 0.0
        %1756 = vmatpush1.msra.mxu0 0.0
        %1757 = vmatprep.subr.mxu0 0.0
        %1758 = vmatpush1.msra.mxu0 0.0
        %1759 = vmatprep.subr.mxu0 0.0
        %1760 = vmatpush1.msra.mxu0 0.0
        %1761 = vmatprep.subr.mxu0 0.0
        %1762 = vmatpush1.msra.mxu0 0.0
        %1763 = vmatprep.subr.mxu0 0.0
        %1764 = vmatpush1.msra.mxu0 0.0
        %1765 = vmatprep.mubr.f32.mxu0 0.0
        %1766 = vmatmul.mubr.f32.gmra.mrb[0].mxu0 %v1699
        %v1767 = vpop.f32.mrb[0].mxu0
        %v1768 = vadd.f32 0.0, %v1767
        %v1769 = vpop.f32.mrb[0].mxu0
        %1770 = vdwg.mxu0
        %v1771 = vadd.f32 %v1530, %v1768
        %v1772 = vld [vmem:[%s10] sm:$0x1]
        %v1774 = vlaneseq
        %v1775 = vshrl.u32 %v1774, 7
        %v1776 = vsub.s32 0, %v1775
        %v1777 = vrot.slane %v1772, %v1776
        %v1779 = vadd.f32 %v1771, %v1777
        %1780 = vst [vmem:[%s530] sm:$0xff] %v1779
        %s1781 = sand.u32 %s287, 1
        %s1782 = scalar_lea.sflag [#allocation4], %s1781
        %s1783 = sand.u32 %s287, 1
        %s1784 = smul.addr %s1783, 8
        %s1785 = scalar_lea.vmem [#allocation14], %s1784
        // Predicated region
        $region93: #{tpu_custom_call.1} parent=63 // pred_check
          %p1786 = pneg %p297
        $region94: #{tpu_custom_call.1} parent=63 // pred_check_branch
          %1788 = sbr.rel (%p1786) target = $region96
        $region95: #{tpu_custom_call.1} parent=63 // pred_region
          %s1790 = ssub.s32 128, 128
          %1791 = vsyncadd %s1782, %s1790
          %s1792 = smul.addr %s33, 128
          %s1793 = scalar_lea.hbm %s11, %s1792
          %s1795 = sshll.u32 %s1785, 4
          %s1796 = int_to_ptr.vmem [resolvable:$true] %s1795
          %1798 = dma.vmem_to_hbm [thread:$0]  %s1796, 128, %s1793, %s1782
        $region96: #{tpu_custom_call.1} parent=63 // pred_fallthru
          _
      $region64: #{tpu_custom_call.1} parent=5 // pred_fallthru
        _
      %p1799 = scmp.le.s32.totalorder 2, %s28
      // Predicated region
      $region97: #{tpu_custom_call.1} parent=5 // pred_check
        %p1800 = pneg %p1799
      $region98: #{tpu_custom_call.1} parent=5 // pred_check_branch
        %1802 = sbr.rel (%p1800) target = $region100
      $region99: #{tpu_custom_call.1} parent=5 // pred_region
        %s1803 = ssub.s32 %s28, 2
        // Predicated region
        $region101: #{tpu_custom_call.1} parent=99 // pred_check
          %p1804 = pneg %p303
        $region102: #{tpu_custom_call.1} parent=99 // pred_check_branch
          %1806 = sbr.rel (%p1804) target = $region104
        $region103: #{tpu_custom_call.1} parent=99 // pred_region
          %s1807 = sand.u32 %s288, 1
          %s1808 = scalar_lea.sflag [#allocation4], %s1807
          %s1809 = sand.u32 %s288, 1
          %s1810 = smul.addr %s1809, 8
          %s1811 = scalar_lea.vmem [#allocation14], %s1810
          %1812 = dma.done %s1808, 128
        $region104: #{tpu_custom_call.1} parent=99 // pred_fallthru
          _
      $region100: #{tpu_custom_call.1} parent=5 // pred_fallthru
        _
    $region6: #{tpu_custom_call.1} parent=1 // loop_footer
      %s32 = sadd.s32 1, %s28
    $region7: #{tpu_custom_call.1} parent=1 // loop_footer_branch
      %27 = sbr.rel target = $region3
    $region8: #{tpu_custom_call.1} parent=1 // loop_exit
      _
    %1813 = vsyncpa [#allocation3], 1
    %s1814 = scalar_lea.sflag [#allocation3], 1
    %1815 = vsyncpa %s1814, 1
    %1816 = vsyncpa [#allocation6], 1
    %s1817 = scalar_lea.sflag [#allocation6], 1
    %1818 = vsyncpa %s1817, 1
    %1819 = vsyncpa [#allocation9], 1
    %1820 = vsyncpa [#allocation12], 1
    %1821 = vsyncpa [#allocation4], 1
    %s1822 = scalar_lea.sflag [#allocation4], 1
    %1823 = vsyncpa %s1822, 1

</llo_original>
